<compile_context>
chip_gen: v7x
topology: tpu7x:2x2x1
jax: 0.10.0
libtpu: 0.0.40
codegen_flags: <defaults>
</compile_context>

<pallas_src>
import jax
import jax.numpy as jnp
from jax.experimental import pallas as pl
from jax.experimental.pallas import tpu as pltpu


def _round_up(x, m):
    return ((x + m - 1) // m) * m


def rgbseq_encoder_kernel(x_ref, w1_ref, b1_ref, w2_ref, b2_ref, o_ref):
    """One grid step: bN rows of x -> bN rows of the output.

    x_ref : (bN, T*V*D0) f32   original (n, t, v, d0) row-major layout
    w1_ref: (D0, D1)     bf16  (VMEM-resident across grid steps)
    b1_ref: (1, D1)      f32
    w2_ref: (T, D1, D2p) bf16  (lane-padded to D2p, resident)
    b2_ref: (1, D2p)     f32
    o_ref : (bN, D2p)    f32   lane-dense output block
    """
    D0, D1 = w1_ref.shape
    T = w2_ref.shape[0]
    V = x_ref.shape[1] // (T * D0)
    inv_v = 1.0 / V

    acc = jnp.zeros(o_ref.shape, jnp.float32)
    for t in range(T):
        # mean_after_mlp1: accumulate relu(x[:, t, v, :] @ w1 + b1) over views
        # incrementally (peak live intermediate is only (bN, D1) f32).
        h_t = None
        for v in range(V):
            off = (t * V + v) * D0
            xv = x_ref[:, off:off + D0].astype(jnp.bfloat16)       # (bN, D0)
            hv = jnp.dot(xv, w1_ref[...], preferred_element_type=jnp.float32)
            hv = jnp.maximum(hv + b1_ref[...], 0.0)                 # (bN, D1) f32
            h_t = hv if h_t is None else h_t + hv
        # mlp2 as an accumulated per-timestep contraction (no flat scratch,
        # no masked lane-offset stores); 1/V applied in f32 before the cast.
        h_t = (h_t * inv_v).astype(jnp.bfloat16)                    # (bN, D1)
        acc = acc + jnp.dot(h_t, w2_ref[t], preferred_element_type=jnp.float32)
    o_ref[...] = jnp.maximum(acc + b2_ref[...], 0.0).astype(o_ref.dtype)


def rgbseq_encoder(x, w1, b1, w2, b2, *, block_n=512):
    """x: (N,T,V,D0) f32; w1: (D0,D1); b1: (1,D1); w2: (T,D1,D2); b2: (1,D2)."""
    N, T, V, D0 = x.shape
    D1 = w1.shape[1]
    D2 = w2.shape[-1]
    D2p = _round_up(D2, 128)

    # Row-block size: multiple of 8 (f32 sublane packing). Per-step VMEM is
    # roughly 2*bN*T*V*D0*4 (double-buffered x) + 2*bN*D2p*4 (output) + small
    # resident weights; e.g. bN=512, T=V=4, D0=32, D2p=128 -> ~2.6 MiB, well
    # inside the default scoped-VMEM limits on v5e (16 MiB) / v6e (32 MiB) /
    # v7x (32 of 64 MiB). Re-sweep block_n per generation if shapes grow.
    bN = min(block_n, _round_up(N, 8))
    bN = max(8, (bN // 8) * 8)
    Np = _round_up(N, bN)
    grid = (Np // bN,)

    # ---- wrapper-side layout plumbing only (no transpose, no extra traffic) --
    # Flatten the trailing dims (contiguous reshape == bitcast) and pad N up to
    # a block multiple so every grid step sees a full, sublane-aligned block.
    x2d = jnp.reshape(x, (N, T * V * D0)).astype(jnp.float32)
    if Np != N:
        x2d = jnp.pad(x2d, ((0, Np - N), (0, 0)))

    w1_b = w1.astype(jnp.bfloat16)
    b1_r = jnp.reshape(b1, (1, D1)).astype(jnp.float32)
    w2_p = jnp.pad(w2.astype(jnp.bfloat16), ((0, 0), (0, 0), (0, D2p - D2)))
    b2_p = jnp.pad(jnp.reshape(b2, (1, D2)).astype(jnp.float32),
                   ((0, 0), (0, D2p - D2)))

    out = pl.pallas_call(
        rgbseq_encoder_kernel,
        out_shape=jax.ShapeDtypeStruct((Np, D2p), jnp.float32),
        grid=grid,
        in_specs=[
            # Streamed, double-buffered x row-block (dominant HBM traffic).
            # TODO(synk): if a v7x profile shows exposed DMA at small bN, add
            # pipeline_mode=pl.Buffered(3) here.
            pl.BlockSpec((bN, T * V * D0), lambda i: (i, 0)),
            # Weights/biases: constant index_map -> DMA'd once, VMEM-resident.
            pl.BlockSpec((D0, D1), lambda i: (0, 0)),
            pl.BlockSpec((1, D1), lambda i: (0, 0)),
            pl.BlockSpec((T, D1, D2p), lambda i: (0, 0, 0)),
            pl.BlockSpec((1, D2p), lambda i: (0, 0)),
        ],
        out_specs=pl.BlockSpec((bN, D2p), lambda i: (i, 0)),
        compiler_params=pltpu.CompilerParams(
            dimension_semantics=("parallel",)),   # v7x: use both TensorCores
    )(x2d, w1_b, b1_r, w2_p, b2_p)
    return out[:N, :D2].astype(x.dtype)


def rgbseq_encoder_reference(x, w1, b1, w2, b2):
    """Pure-f32 reference mirroring the PyTorch forward exactly."""
    N, T, V, D0 = x.shape
    D1 = w1.shape[1]
    D2 = w2.shape[-1]
    h = jnp.maximum(
        jnp.einsum('ntvd,de->ntve', x, w1,
                   precision=jax.lax.Precision.HIGHEST)
        + jnp.reshape(b1, (1, 1, 1, D1)), 0.0)
    hm = jnp.mean(h, axis=2)
    flat = hm.reshape(N, T * D1)
    return jnp.maximum(
        jnp.dot(flat, jnp.reshape(w2, (T * D1, D2)),
                precision=jax.lax.Precision.HIGHEST)
        + jnp.reshape(b2, (1, D2)), 0.0)


def rgbseq_encoder_reference_bf16(x, w1, b1, w2, b2):
    """Reference mirroring the kernel's bf16 MXU operands + f32 accumulation."""
    N, T, V, D0 = x.shape
    D1 = w1.shape[1]
    D2 = w2.shape[-1]
    xb = x.astype(jnp.bfloat16).astype(jnp.float32)
    w1b = w1.astype(jnp.bfloat16).astype(jnp.float32)
    h = jnp.maximum(
        jnp.einsum('ntvd,de->ntve', xb, w1b,
                   precision=jax.lax.Precision.HIGHEST)
        + jnp.reshape(b1, (1, 1, 1, D1)), 0.0)
    hm = jnp.sum(h, axis=2) * (1.0 / V)                       # f32 mean
    flat = hm.reshape(N, T * D1).astype(jnp.bfloat16).astype(jnp.float32)
    w2b = jnp.reshape(w2, (T * D1, D2)).astype(jnp.bfloat16).astype(jnp.float32)
    return jnp.maximum(
        jnp.dot(flat, w2b, precision=jax.lax.Precision.HIGHEST)
        + jnp.reshape(b2, (1, D2)), 0.0)


if __name__ == "__main__":
    # Small shapes consistent with the module: sequence length T, views V, D0.
    # N=100 deliberately not a multiple of the block to exercise padding, and
    # block_n=32 to exercise a multi-step grid (grid = Np//bN = 4).
    N, T, V, D0 = 100, 4, 4, 32   # length = T = 4
    D1, D2 = 32, 64

    key = jax.random.PRNGKey(0)
    kx, kw1, kb1, kw2, kb2 = jax.random.split(key, 5)

    x = jax.random.normal(kx, (N, T, V, D0), dtype=jnp.float32)
    # Deterministic synthetic parameters (nn.Linear(D0, D1), nn.Linear(T*D1, D2)).
    w1 = jax.random.normal(kw1, (D0, D1), dtype=jnp.float32) * 0.05
    b1 = jax.random.normal(kb1, (1, D1), dtype=jnp.float32) * 0.05
    w2 = jax.random.normal(kw2, (T, D1, D2), dtype=jnp.float32) * 0.05
    b2 = jax.random.normal(kb2, (1, D2), dtype=jnp.float32) * 0.05

    out = jax.block_until_ready(rgbseq_encoder(x, w1, b1, w2, b2, block_n=32))
    assert out.shape == (N, D2), out.shape

    ref_bf16 = rgbseq_encoder_reference_bf16(x, w1, b1, w2, b2)
    ref_f32 = rgbseq_encoder_reference(x, w1, b1, w2, b2)
    err_bf16 = float(jnp.max(jnp.abs(out - ref_bf16)))   # same-operand reference
    err_f32 = float(jnp.max(jnp.abs(out - ref_f32)))     # true f32 reference
    assert err_bf16 < 1e-3, ("bf16-mirrored reference mismatch", err_bf16)
    assert err_f32 < 3e-2, ("f32 reference mismatch", err_f32)

    print("KERNEL_OK")
</pallas_src>

<mosaic_0001>
module attributes {stable_mosaic.version = 11 : i64} {
  func.func @rgbseq_encoder_kernel(%arg0: i32, %arg1: memref<32x512xf32, #tpu.memory_space<vmem>>, %arg2: memref<32x32xbf16, #tpu.memory_space<vmem>>, %arg3: memref<1x32xf32, #tpu.memory_space<vmem>>, %arg4: memref<4x32x128xbf16, #tpu.memory_space<vmem>>, %arg5: memref<1x128xf32, #tpu.memory_space<vmem>>, %arg6: memref<32x128xf32, #tpu.memory_space<vmem>>) attributes {dimension_semantics = [#tpu.dimension_semantics<parallel>], iteration_bounds = array<i64: 4>, scalar_prefetch = 0 : i64, scratch_operands = 0 : i64, tpu.core_type = #tpu.core_type<tc>, window_params = [{transform_indices = @transform_0, window_bounds = array<i64: 32, 512>}, {pipeline_mode = #tpu.pipeline_mode<synchronous>, transform_indices = @transform_1, window_bounds = array<i64: 32, 32>}, {pipeline_mode = #tpu.pipeline_mode<synchronous>, transform_indices = @transform_2, window_bounds = array<i64: 1, 32>}, {pipeline_mode = #tpu.pipeline_mode<synchronous>, transform_indices = @transform_3, window_bounds = array<i64: 4, 32, 128>}, {pipeline_mode = #tpu.pipeline_mode<synchronous>, transform_indices = @transform_4, window_bounds = array<i64: 1, 128>}, {transform_indices = @transform_5, window_bounds = array<i64: 32, 128>}]} {
    %cst = arith.constant 0.000000e+00 : f32
    %0 = vector.broadcast %cst : f32 to vector<32x128xf32>
    %c0 = arith.constant 0 : index
    %c0_0 = arith.constant 0 : index
    %1 = vector.load %arg1[%c0, %c0_0] : memref<32x512xf32, #tpu.memory_space<vmem>>, vector<32x32xf32>
    %2 = arith.truncf %1 : vector<32x32xf32> to vector<32x32xbf16>
    %c0_1 = arith.constant 0 : index
    %c0_2 = arith.constant 0 : index
    %3 = vector.load %arg2[%c0_1, %c0_2] : memref<32x32xbf16, #tpu.memory_space<vmem>>, vector<32x32xbf16>
    %cst_3 = arith.constant dense<0.000000e+00> : vector<32x32xf32>
    %4 = tpu.matmul %2, %3, %cst_3 {dimension_numbers = #tpu.dot_dimension_numbers<[1], [0], [0], [1], [0, 0, 1, 1], [], []>} : vector<32x32xbf16>, vector<32x32xbf16>, vector<32x32xf32> -> vector<32x32xf32>
    %c0_4 = arith.constant 0 : index
    %c0_5 = arith.constant 0 : index
    %5 = vector.load %arg3[%c0_4, %c0_5] : memref<1x32xf32, #tpu.memory_space<vmem>>, vector<1x32xf32>
    %6 = vector.broadcast %5 : vector<1x32xf32> to vector<32x32xf32>
    %7 = arith.addf %4, %6 : vector<32x32xf32>
    %cst_6 = arith.constant 0.000000e+00 : f32
    %8 = vector.broadcast %cst_6 : f32 to vector<32x32xf32>
    %9 = arith.maximumf %7, %8 : vector<32x32xf32>
    %c0_7 = arith.constant 0 : index
    %c32 = arith.constant 32 : index
    %10 = vector.load %arg1[%c0_7, %c32] : memref<32x512xf32, #tpu.memory_space<vmem>>, vector<32x32xf32>
    %11 = arith.truncf %10 : vector<32x32xf32> to vector<32x32xbf16>
    %c0_8 = arith.constant 0 : index
    %c0_9 = arith.constant 0 : index
    %12 = vector.load %arg2[%c0_8, %c0_9] : memref<32x32xbf16, #tpu.memory_space<vmem>>, vector<32x32xbf16>
    %cst_10 = arith.constant dense<0.000000e+00> : vector<32x32xf32>
    %13 = tpu.matmul %11, %12, %cst_10 {dimension_numbers = #tpu.dot_dimension_numbers<[1], [0], [0], [1], [0, 0, 1, 1], [], []>} : vector<32x32xbf16>, vector<32x32xbf16>, vector<32x32xf32> -> vector<32x32xf32>
    %c0_11 = arith.constant 0 : index
    %c0_12 = arith.constant 0 : index
    %14 = vector.load %arg3[%c0_11, %c0_12] : memref<1x32xf32, #tpu.memory_space<vmem>>, vector<1x32xf32>
    %15 = vector.broadcast %14 : vector<1x32xf32> to vector<32x32xf32>
    %16 = arith.addf %13, %15 : vector<32x32xf32>
    %cst_13 = arith.constant 0.000000e+00 : f32
    %17 = vector.broadcast %cst_13 : f32 to vector<32x32xf32>
    %18 = arith.maximumf %16, %17 : vector<32x32xf32>
    %19 = arith.addf %9, %18 : vector<32x32xf32>
    %c0_14 = arith.constant 0 : index
    %c64 = arith.constant 64 : index
    %20 = vector.load %arg1[%c0_14, %c64] : memref<32x512xf32, #tpu.memory_space<vmem>>, vector<32x32xf32>
    %21 = arith.truncf %20 : vector<32x32xf32> to vector<32x32xbf16>
    %c0_15 = arith.constant 0 : index
    %c0_16 = arith.constant 0 : index
    %22 = vector.load %arg2[%c0_15, %c0_16] : memref<32x32xbf16, #tpu.memory_space<vmem>>, vector<32x32xbf16>
    %cst_17 = arith.constant dense<0.000000e+00> : vector<32x32xf32>
    %23 = tpu.matmul %21, %22, %cst_17 {dimension_numbers = #tpu.dot_dimension_numbers<[1], [0], [0], [1], [0, 0, 1, 1], [], []>} : vector<32x32xbf16>, vector<32x32xbf16>, vector<32x32xf32> -> vector<32x32xf32>
    %c0_18 = arith.constant 0 : index
    %c0_19 = arith.constant 0 : index
    %24 = vector.load %arg3[%c0_18, %c0_19] : memref<1x32xf32, #tpu.memory_space<vmem>>, vector<1x32xf32>
    %25 = vector.broadcast %24 : vector<1x32xf32> to vector<32x32xf32>
    %26 = arith.addf %23, %25 : vector<32x32xf32>
    %cst_20 = arith.constant 0.000000e+00 : f32
    %27 = vector.broadcast %cst_20 : f32 to vector<32x32xf32>
    %28 = arith.maximumf %26, %27 : vector<32x32xf32>
    %29 = arith.addf %19, %28 : vector<32x32xf32>
    %c0_21 = arith.constant 0 : index
    %c96 = arith.constant 96 : index
    %30 = vector.load %arg1[%c0_21, %c96] : memref<32x512xf32, #tpu.memory_space<vmem>>, vector<32x32xf32>
    %31 = arith.truncf %30 : vector<32x32xf32> to vector<32x32xbf16>
    %c0_22 = arith.constant 0 : index
    %c0_23 = arith.constant 0 : index
    %32 = vector.load %arg2[%c0_22, %c0_23] : memref<32x32xbf16, #tpu.memory_space<vmem>>, vector<32x32xbf16>
    %cst_24 = arith.constant dense<0.000000e+00> : vector<32x32xf32>
    %33 = tpu.matmul %31, %32, %cst_24 {dimension_numbers = #tpu.dot_dimension_numbers<[1], [0], [0], [1], [0, 0, 1, 1], [], []>} : vector<32x32xbf16>, vector<32x32xbf16>, vector<32x32xf32> -> vector<32x32xf32>
    %c0_25 = arith.constant 0 : index
    %c0_26 = arith.constant 0 : index
    %34 = vector.load %arg3[%c0_25, %c0_26] : memref<1x32xf32, #tpu.memory_space<vmem>>, vector<1x32xf32>
    %35 = vector.broadcast %34 : vector<1x32xf32> to vector<32x32xf32>
    %36 = arith.addf %33, %35 : vector<32x32xf32>
    %cst_27 = arith.constant 0.000000e+00 : f32
    %37 = vector.broadcast %cst_27 : f32 to vector<32x32xf32>
    %38 = arith.maximumf %36, %37 : vector<32x32xf32>
    %39 = arith.addf %29, %38 : vector<32x32xf32>
    %cst_28 = arith.constant 2.500000e-01 : f32
    %40 = vector.broadcast %cst_28 : f32 to vector<32x32xf32>
    %41 = arith.mulf %39, %40 : vector<32x32xf32>
    %42 = arith.truncf %41 : vector<32x32xf32> to vector<32x32xbf16>
    %c0_29 = arith.constant 0 : index
    %c0_30 = arith.constant 0 : index
    %c0_31 = arith.constant 0 : index
    %43 = vector.load %arg4[%c0_29, %c0_30, %c0_31] : memref<4x32x128xbf16, #tpu.memory_space<vmem>>, vector<1x32x128xbf16>
    %44 = vector.shape_cast %43 : vector<1x32x128xbf16> to vector<32x128xbf16>
    %cst_32 = arith.constant dense<0.000000e+00> : vector<32x128xf32>
    %45 = tpu.matmul %42, %44, %cst_32 {dimension_numbers = #tpu.dot_dimension_numbers<[1], [0], [0], [1], [0, 0, 1, 1], [], []>} : vector<32x32xbf16>, vector<32x128xbf16>, vector<32x128xf32> -> vector<32x128xf32>
    %46 = arith.addf %0, %45 : vector<32x128xf32>
    %c0_33 = arith.constant 0 : index
    %c128 = arith.constant 128 : index
    %47 = vector.load %arg1[%c0_33, %c128] : memref<32x512xf32, #tpu.memory_space<vmem>>, vector<32x32xf32>
    %48 = arith.truncf %47 : vector<32x32xf32> to vector<32x32xbf16>
    %c0_34 = arith.constant 0 : index
    %c0_35 = arith.constant 0 : index
    %49 = vector.load %arg2[%c0_34, %c0_35] : memref<32x32xbf16, #tpu.memory_space<vmem>>, vector<32x32xbf16>
    %cst_36 = arith.constant dense<0.000000e+00> : vector<32x32xf32>
    %50 = tpu.matmul %48, %49, %cst_36 {dimension_numbers = #tpu.dot_dimension_numbers<[1], [0], [0], [1], [0, 0, 1, 1], [], []>} : vector<32x32xbf16>, vector<32x32xbf16>, vector<32x32xf32> -> vector<32x32xf32>
    %c0_37 = arith.constant 0 : index
    %c0_38 = arith.constant 0 : index
    %51 = vector.load %arg3[%c0_37, %c0_38] : memref<1x32xf32, #tpu.memory_space<vmem>>, vector<1x32xf32>
    %52 = vector.broadcast %51 : vector<1x32xf32> to vector<32x32xf32>
    %53 = arith.addf %50, %52 : vector<32x32xf32>
    %cst_39 = arith.constant 0.000000e+00 : f32
    %54 = vector.broadcast %cst_39 : f32 to vector<32x32xf32>
    %55 = arith.maximumf %53, %54 : vector<32x32xf32>
    %c0_40 = arith.constant 0 : index
    %c160 = arith.constant 160 : index
    %56 = vector.load %arg1[%c0_40, %c160] : memref<32x512xf32, #tpu.memory_space<vmem>>, vector<32x32xf32>
    %57 = arith.truncf %56 : vector<32x32xf32> to vector<32x32xbf16>
    %c0_41 = arith.constant 0 : index
    %c0_42 = arith.constant 0 : index
    %58 = vector.load %arg2[%c0_41, %c0_42] : memref<32x32xbf16, #tpu.memory_space<vmem>>, vector<32x32xbf16>
    %cst_43 = arith.constant dense<0.000000e+00> : vector<32x32xf32>
    %59 = tpu.matmul %57, %58, %cst_43 {dimension_numbers = #tpu.dot_dimension_numbers<[1], [0], [0], [1], [0, 0, 1, 1], [], []>} : vector<32x32xbf16>, vector<32x32xbf16>, vector<32x32xf32> -> vector<32x32xf32>
    %c0_44 = arith.constant 0 : index
    %c0_45 = arith.constant 0 : index
    %60 = vector.load %arg3[%c0_44, %c0_45] : memref<1x32xf32, #tpu.memory_space<vmem>>, vector<1x32xf32>
    %61 = vector.broadcast %60 : vector<1x32xf32> to vector<32x32xf32>
    %62 = arith.addf %59, %61 : vector<32x32xf32>
    %cst_46 = arith.constant 0.000000e+00 : f32
    %63 = vector.broadcast %cst_46 : f32 to vector<32x32xf32>
    %64 = arith.maximumf %62, %63 : vector<32x32xf32>
    %65 = arith.addf %55, %64 : vector<32x32xf32>
    %c0_47 = arith.constant 0 : index
    %c192 = arith.constant 192 : index
    %66 = vector.load %arg1[%c0_47, %c192] : memref<32x512xf32, #tpu.memory_space<vmem>>, vector<32x32xf32>
    %67 = arith.truncf %66 : vector<32x32xf32> to vector<32x32xbf16>
    %c0_48 = arith.constant 0 : index
    %c0_49 = arith.constant 0 : index
    %68 = vector.load %arg2[%c0_48, %c0_49] : memref<32x32xbf16, #tpu.memory_space<vmem>>, vector<32x32xbf16>
    %cst_50 = arith.constant dense<0.000000e+00> : vector<32x32xf32>
    %69 = tpu.matmul %67, %68, %cst_50 {dimension_numbers = #tpu.dot_dimension_numbers<[1], [0], [0], [1], [0, 0, 1, 1], [], []>} : vector<32x32xbf16>, vector<32x32xbf16>, vector<32x32xf32> -> vector<32x32xf32>
    %c0_51 = arith.constant 0 : index
    %c0_52 = arith.constant 0 : index
    %70 = vector.load %arg3[%c0_51, %c0_52] : memref<1x32xf32, #tpu.memory_space<vmem>>, vector<1x32xf32>
    %71 = vector.broadcast %70 : vector<1x32xf32> to vector<32x32xf32>
    %72 = arith.addf %69, %71 : vector<32x32xf32>
    %cst_53 = arith.constant 0.000000e+00 : f32
    %73 = vector.broadcast %cst_53 : f32 to vector<32x32xf32>
    %74 = arith.maximumf %72, %73 : vector<32x32xf32>
    %75 = arith.addf %65, %74 : vector<32x32xf32>
    %c0_54 = arith.constant 0 : index
    %c224 = arith.constant 224 : index
    %76 = vector.load %arg1[%c0_54, %c224] : memref<32x512xf32, #tpu.memory_space<vmem>>, vector<32x32xf32>
    %77 = arith.truncf %76 : vector<32x32xf32> to vector<32x32xbf16>
    %c0_55 = arith.constant 0 : index
    %c0_56 = arith.constant 0 : index
    %78 = vector.load %arg2[%c0_55, %c0_56] : memref<32x32xbf16, #tpu.memory_space<vmem>>, vector<32x32xbf16>
    %cst_57 = arith.constant dense<0.000000e+00> : vector<32x32xf32>
    %79 = tpu.matmul %77, %78, %cst_57 {dimension_numbers = #tpu.dot_dimension_numbers<[1], [0], [0], [1], [0, 0, 1, 1], [], []>} : vector<32x32xbf16>, vector<32x32xbf16>, vector<32x32xf32> -> vector<32x32xf32>
    %c0_58 = arith.constant 0 : index
    %c0_59 = arith.constant 0 : index
    %80 = vector.load %arg3[%c0_58, %c0_59] : memref<1x32xf32, #tpu.memory_space<vmem>>, vector<1x32xf32>
    %81 = vector.broadcast %80 : vector<1x32xf32> to vector<32x32xf32>
    %82 = arith.addf %79, %81 : vector<32x32xf32>
    %cst_60 = arith.constant 0.000000e+00 : f32
    %83 = vector.broadcast %cst_60 : f32 to vector<32x32xf32>
    %84 = arith.maximumf %82, %83 : vector<32x32xf32>
    %85 = arith.addf %75, %84 : vector<32x32xf32>
    %cst_61 = arith.constant 2.500000e-01 : f32
    %86 = vector.broadcast %cst_61 : f32 to vector<32x32xf32>
    %87 = arith.mulf %85, %86 : vector<32x32xf32>
    %88 = arith.truncf %87 : vector<32x32xf32> to vector<32x32xbf16>
    %c1 = arith.constant 1 : index
    %c0_62 = arith.constant 0 : index
    %c0_63 = arith.constant 0 : index
    %89 = vector.load %arg4[%c1, %c0_62, %c0_63] : memref<4x32x128xbf16, #tpu.memory_space<vmem>>, vector<1x32x128xbf16>
    %90 = vector.shape_cast %89 : vector<1x32x128xbf16> to vector<32x128xbf16>
    %cst_64 = arith.constant dense<0.000000e+00> : vector<32x128xf32>
    %91 = tpu.matmul %88, %90, %cst_64 {dimension_numbers = #tpu.dot_dimension_numbers<[1], [0], [0], [1], [0, 0, 1, 1], [], []>} : vector<32x32xbf16>, vector<32x128xbf16>, vector<32x128xf32> -> vector<32x128xf32>
    %92 = arith.addf %46, %91 : vector<32x128xf32>
    %c0_65 = arith.constant 0 : index
    %c256 = arith.constant 256 : index
    %93 = vector.load %arg1[%c0_65, %c256] : memref<32x512xf32, #tpu.memory_space<vmem>>, vector<32x32xf32>
    %94 = arith.truncf %93 : vector<32x32xf32> to vector<32x32xbf16>
    %c0_66 = arith.constant 0 : index
    %c0_67 = arith.constant 0 : index
    %95 = vector.load %arg2[%c0_66, %c0_67] : memref<32x32xbf16, #tpu.memory_space<vmem>>, vector<32x32xbf16>
    %cst_68 = arith.constant dense<0.000000e+00> : vector<32x32xf32>
    %96 = tpu.matmul %94, %95, %cst_68 {dimension_numbers = #tpu.dot_dimension_numbers<[1], [0], [0], [1], [0, 0, 1, 1], [], []>} : vector<32x32xbf16>, vector<32x32xbf16>, vector<32x32xf32> -> vector<32x32xf32>
    %c0_69 = arith.constant 0 : index
    %c0_70 = arith.constant 0 : index
    %97 = vector.load %arg3[%c0_69, %c0_70] : memref<1x32xf32, #tpu.memory_space<vmem>>, vector<1x32xf32>
    %98 = vector.broadcast %97 : vector<1x32xf32> to vector<32x32xf32>
    %99 = arith.addf %96, %98 : vector<32x32xf32>
    %cst_71 = arith.constant 0.000000e+00 : f32
    %100 = vector.broadcast %cst_71 : f32 to vector<32x32xf32>
    %101 = arith.maximumf %99, %100 : vector<32x32xf32>
    %c0_72 = arith.constant 0 : index
    %c288 = arith.constant 288 : index
    %102 = vector.load %arg1[%c0_72, %c288] : memref<32x512xf32, #tpu.memory_space<vmem>>, vector<32x32xf32>
    %103 = arith.truncf %102 : vector<32x32xf32> to vector<32x32xbf16>
    %c0_73 = arith.constant 0 : index
    %c0_74 = arith.constant 0 : index
    %104 = vector.load %arg2[%c0_73, %c0_74] : memref<32x32xbf16, #tpu.memory_space<vmem>>, vector<32x32xbf16>
    %cst_75 = arith.constant dense<0.000000e+00> : vector<32x32xf32>
    %105 = tpu.matmul %103, %104, %cst_75 {dimension_numbers = #tpu.dot_dimension_numbers<[1], [0], [0], [1], [0, 0, 1, 1], [], []>} : vector<32x32xbf16>, vector<32x32xbf16>, vector<32x32xf32> -> vector<32x32xf32>
    %c0_76 = arith.constant 0 : index
    %c0_77 = arith.constant 0 : index
    %106 = vector.load %arg3[%c0_76, %c0_77] : memref<1x32xf32, #tpu.memory_space<vmem>>, vector<1x32xf32>
    %107 = vector.broadcast %106 : vector<1x32xf32> to vector<32x32xf32>
    %108 = arith.addf %105, %107 : vector<32x32xf32>
    %cst_78 = arith.constant 0.000000e+00 : f32
    %109 = vector.broadcast %cst_78 : f32 to vector<32x32xf32>
    %110 = arith.maximumf %108, %109 : vector<32x32xf32>
    %111 = arith.addf %101, %110 : vector<32x32xf32>
    %c0_79 = arith.constant 0 : index
    %c320 = arith.constant 320 : index
    %112 = vector.load %arg1[%c0_79, %c320] : memref<32x512xf32, #tpu.memory_space<vmem>>, vector<32x32xf32>
    %113 = arith.truncf %112 : vector<32x32xf32> to vector<32x32xbf16>
    %c0_80 = arith.constant 0 : index
    %c0_81 = arith.constant 0 : index
    %114 = vector.load %arg2[%c0_80, %c0_81] : memref<32x32xbf16, #tpu.memory_space<vmem>>, vector<32x32xbf16>
    %cst_82 = arith.constant dense<0.000000e+00> : vector<32x32xf32>
    %115 = tpu.matmul %113, %114, %cst_82 {dimension_numbers = #tpu.dot_dimension_numbers<[1], [0], [0], [1], [0, 0, 1, 1], [], []>} : vector<32x32xbf16>, vector<32x32xbf16>, vector<32x32xf32> -> vector<32x32xf32>
    %c0_83 = arith.constant 0 : index
    %c0_84 = arith.constant 0 : index
    %116 = vector.load %arg3[%c0_83, %c0_84] : memref<1x32xf32, #tpu.memory_space<vmem>>, vector<1x32xf32>
    %117 = vector.broadcast %116 : vector<1x32xf32> to vector<32x32xf32>
    %118 = arith.addf %115, %117 : vector<32x32xf32>
    %cst_85 = arith.constant 0.000000e+00 : f32
    %119 = vector.broadcast %cst_85 : f32 to vector<32x32xf32>
    %120 = arith.maximumf %118, %119 : vector<32x32xf32>
    %121 = arith.addf %111, %120 : vector<32x32xf32>
    %c0_86 = arith.constant 0 : index
    %c352 = arith.constant 352 : index
    %122 = vector.load %arg1[%c0_86, %c352] : memref<32x512xf32, #tpu.memory_space<vmem>>, vector<32x32xf32>
    %123 = arith.truncf %122 : vector<32x32xf32> to vector<32x32xbf16>
    %c0_87 = arith.constant 0 : index
    %c0_88 = arith.constant 0 : index
    %124 = vector.load %arg2[%c0_87, %c0_88] : memref<32x32xbf16, #tpu.memory_space<vmem>>, vector<32x32xbf16>
    %cst_89 = arith.constant dense<0.000000e+00> : vector<32x32xf32>
    %125 = tpu.matmul %123, %124, %cst_89 {dimension_numbers = #tpu.dot_dimension_numbers<[1], [0], [0], [1], [0, 0, 1, 1], [], []>} : vector<32x32xbf16>, vector<32x32xbf16>, vector<32x32xf32> -> vector<32x32xf32>
    %c0_90 = arith.constant 0 : index
    %c0_91 = arith.constant 0 : index
    %126 = vector.load %arg3[%c0_90, %c0_91] : memref<1x32xf32, #tpu.memory_space<vmem>>, vector<1x32xf32>
    %127 = vector.broadcast %126 : vector<1x32xf32> to vector<32x32xf32>
    %128 = arith.addf %125, %127 : vector<32x32xf32>
    %cst_92 = arith.constant 0.000000e+00 : f32
    %129 = vector.broadcast %cst_92 : f32 to vector<32x32xf32>
    %130 = arith.maximumf %128, %129 : vector<32x32xf32>
    %131 = arith.addf %121, %130 : vector<32x32xf32>
    %cst_93 = arith.constant 2.500000e-01 : f32
    %132 = vector.broadcast %cst_93 : f32 to vector<32x32xf32>
    %133 = arith.mulf %131, %132 : vector<32x32xf32>
    %134 = arith.truncf %133 : vector<32x32xf32> to vector<32x32xbf16>
    %c2 = arith.constant 2 : index
    %c0_94 = arith.constant 0 : index
    %c0_95 = arith.constant 0 : index
    %135 = vector.load %arg4[%c2, %c0_94, %c0_95] : memref<4x32x128xbf16, #tpu.memory_space<vmem>>, vector<1x32x128xbf16>
    %136 = vector.shape_cast %135 : vector<1x32x128xbf16> to vector<32x128xbf16>
    %cst_96 = arith.constant dense<0.000000e+00> : vector<32x128xf32>
    %137 = tpu.matmul %134, %136, %cst_96 {dimension_numbers = #tpu.dot_dimension_numbers<[1], [0], [0], [1], [0, 0, 1, 1], [], []>} : vector<32x32xbf16>, vector<32x128xbf16>, vector<32x128xf32> -> vector<32x128xf32>
    %138 = arith.addf %92, %137 : vector<32x128xf32>
    %c0_97 = arith.constant 0 : index
    %c384 = arith.constant 384 : index
    %139 = vector.load %arg1[%c0_97, %c384] : memref<32x512xf32, #tpu.memory_space<vmem>>, vector<32x32xf32>
    %140 = arith.truncf %139 : vector<32x32xf32> to vector<32x32xbf16>
    %c0_98 = arith.constant 0 : index
    %c0_99 = arith.constant 0 : index
    %141 = vector.load %arg2[%c0_98, %c0_99] : memref<32x32xbf16, #tpu.memory_space<vmem>>, vector<32x32xbf16>
    %cst_100 = arith.constant dense<0.000000e+00> : vector<32x32xf32>
    %142 = tpu.matmul %140, %141, %cst_100 {dimension_numbers = #tpu.dot_dimension_numbers<[1], [0], [0], [1], [0, 0, 1, 1], [], []>} : vector<32x32xbf16>, vector<32x32xbf16>, vector<32x32xf32> -> vector<32x32xf32>
    %c0_101 = arith.constant 0 : index
    %c0_102 = arith.constant 0 : index
    %143 = vector.load %arg3[%c0_101, %c0_102] : memref<1x32xf32, #tpu.memory_space<vmem>>, vector<1x32xf32>
    %144 = vector.broadcast %143 : vector<1x32xf32> to vector<32x32xf32>
    %145 = arith.addf %142, %144 : vector<32x32xf32>
    %cst_103 = arith.constant 0.000000e+00 : f32
    %146 = vector.broadcast %cst_103 : f32 to vector<32x32xf32>
    %147 = arith.maximumf %145, %146 : vector<32x32xf32>
    %c0_104 = arith.constant 0 : index
    %c416 = arith.constant 416 : index
    %148 = vector.load %arg1[%c0_104, %c416] : memref<32x512xf32, #tpu.memory_space<vmem>>, vector<32x32xf32>
    %149 = arith.truncf %148 : vector<32x32xf32> to vector<32x32xbf16>
    %c0_105 = arith.constant 0 : index
    %c0_106 = arith.constant 0 : index
    %150 = vector.load %arg2[%c0_105, %c0_106] : memref<32x32xbf16, #tpu.memory_space<vmem>>, vector<32x32xbf16>
    %cst_107 = arith.constant dense<0.000000e+00> : vector<32x32xf32>
    %151 = tpu.matmul %149, %150, %cst_107 {dimension_numbers = #tpu.dot_dimension_numbers<[1], [0], [0], [1], [0, 0, 1, 1], [], []>} : vector<32x32xbf16>, vector<32x32xbf16>, vector<32x32xf32> -> vector<32x32xf32>
    %c0_108 = arith.constant 0 : index
    %c0_109 = arith.constant 0 : index
    %152 = vector.load %arg3[%c0_108, %c0_109] : memref<1x32xf32, #tpu.memory_space<vmem>>, vector<1x32xf32>
    %153 = vector.broadcast %152 : vector<1x32xf32> to vector<32x32xf32>
    %154 = arith.addf %151, %153 : vector<32x32xf32>
    %cst_110 = arith.constant 0.000000e+00 : f32
    %155 = vector.broadcast %cst_110 : f32 to vector<32x32xf32>
    %156 = arith.maximumf %154, %155 : vector<32x32xf32>
    %157 = arith.addf %147, %156 : vector<32x32xf32>
    %c0_111 = arith.constant 0 : index
    %c448 = arith.constant 448 : index
    %158 = vector.load %arg1[%c0_111, %c448] : memref<32x512xf32, #tpu.memory_space<vmem>>, vector<32x32xf32>
    %159 = arith.truncf %158 : vector<32x32xf32> to vector<32x32xbf16>
    %c0_112 = arith.constant 0 : index
    %c0_113 = arith.constant 0 : index
    %160 = vector.load %arg2[%c0_112, %c0_113] : memref<32x32xbf16, #tpu.memory_space<vmem>>, vector<32x32xbf16>
    %cst_114 = arith.constant dense<0.000000e+00> : vector<32x32xf32>
    %161 = tpu.matmul %159, %160, %cst_114 {dimension_numbers = #tpu.dot_dimension_numbers<[1], [0], [0], [1], [0, 0, 1, 1], [], []>} : vector<32x32xbf16>, vector<32x32xbf16>, vector<32x32xf32> -> vector<32x32xf32>
    %c0_115 = arith.constant 0 : index
    %c0_116 = arith.constant 0 : index
    %162 = vector.load %arg3[%c0_115, %c0_116] : memref<1x32xf32, #tpu.memory_space<vmem>>, vector<1x32xf32>
    %163 = vector.broadcast %162 : vector<1x32xf32> to vector<32x32xf32>
    %164 = arith.addf %161, %163 : vector<32x32xf32>
    %cst_117 = arith.constant 0.000000e+00 : f32
    %165 = vector.broadcast %cst_117 : f32 to vector<32x32xf32>
    %166 = arith.maximumf %164, %165 : vector<32x32xf32>
    %167 = arith.addf %157, %166 : vector<32x32xf32>
    %c0_118 = arith.constant 0 : index
    %c480 = arith.constant 480 : index
    %168 = vector.load %arg1[%c0_118, %c480] : memref<32x512xf32, #tpu.memory_space<vmem>>, vector<32x32xf32>
    %169 = arith.truncf %168 : vector<32x32xf32> to vector<32x32xbf16>
    %c0_119 = arith.constant 0 : index
    %c0_120 = arith.constant 0 : index
    %170 = vector.load %arg2[%c0_119, %c0_120] : memref<32x32xbf16, #tpu.memory_space<vmem>>, vector<32x32xbf16>
    %cst_121 = arith.constant dense<0.000000e+00> : vector<32x32xf32>
    %171 = tpu.matmul %169, %170, %cst_121 {dimension_numbers = #tpu.dot_dimension_numbers<[1], [0], [0], [1], [0, 0, 1, 1], [], []>} : vector<32x32xbf16>, vector<32x32xbf16>, vector<32x32xf32> -> vector<32x32xf32>
    %c0_122 = arith.constant 0 : index
    %c0_123 = arith.constant 0 : index
    %172 = vector.load %arg3[%c0_122, %c0_123] : memref<1x32xf32, #tpu.memory_space<vmem>>, vector<1x32xf32>
    %173 = vector.broadcast %172 : vector<1x32xf32> to vector<32x32xf32>
    %174 = arith.addf %171, %173 : vector<32x32xf32>
    %cst_124 = arith.constant 0.000000e+00 : f32
    %175 = vector.broadcast %cst_124 : f32 to vector<32x32xf32>
    %176 = arith.maximumf %174, %175 : vector<32x32xf32>
    %177 = arith.addf %167, %176 : vector<32x32xf32>
    %cst_125 = arith.constant 2.500000e-01 : f32
    %178 = vector.broadcast %cst_125 : f32 to vector<32x32xf32>
    %179 = arith.mulf %177, %178 : vector<32x32xf32>
    %180 = arith.truncf %179 : vector<32x32xf32> to vector<32x32xbf16>
    %c3 = arith.constant 3 : index
    %c0_126 = arith.constant 0 : index
    %c0_127 = arith.constant 0 : index
    %181 = vector.load %arg4[%c3, %c0_126, %c0_127] : memref<4x32x128xbf16, #tpu.memory_space<vmem>>, vector<1x32x128xbf16>
    %182 = vector.shape_cast %181 : vector<1x32x128xbf16> to vector<32x128xbf16>
    %cst_128 = arith.constant dense<0.000000e+00> : vector<32x128xf32>
    %183 = tpu.matmul %180, %182, %cst_128 {dimension_numbers = #tpu.dot_dimension_numbers<[1], [0], [0], [1], [0, 0, 1, 1], [], []>} : vector<32x32xbf16>, vector<32x128xbf16>, vector<32x128xf32> -> vector<32x128xf32>
    %184 = arith.addf %138, %183 : vector<32x128xf32>
    %c0_129 = arith.constant 0 : index
    %c0_130 = arith.constant 0 : index
    %185 = vector.load %arg5[%c0_129, %c0_130] : memref<1x128xf32, #tpu.memory_space<vmem>>, vector<1x128xf32>
    %186 = vector.broadcast %185 : vector<1x128xf32> to vector<32x128xf32>
    %187 = arith.addf %184, %186 : vector<32x128xf32>
    %cst_131 = arith.constant 0.000000e+00 : f32
    %188 = vector.broadcast %cst_131 : f32 to vector<32x128xf32>
    %189 = arith.maximumf %187, %188 : vector<32x128xf32>
    %c0_132 = arith.constant 0 : index
    %c0_133 = arith.constant 0 : index
    %190 = vector.load %arg6[%c0_132, %c0_133] : memref<32x128xf32, #tpu.memory_space<vmem>>, vector<32x128xf32>
    tpu.vector_store %arg6[%c0_132, %c0_133], %189 {strides = array<i32>} : memref<32x128xf32, #tpu.memory_space<vmem>>, vector<32x128xf32>,
    return
  }
  func.func @transform_0(%arg0: i32) -> (i32, i32) {
    %c0_i32 = arith.constant 0 : i32
    %c0_i32_0 = arith.constant 0 : i32
    return %arg0, %c0_i32 : i32, i32
  }
  func.func @transform_1(%arg0: i32) -> (i32, i32) {
    %c0_i32 = arith.constant 0 : i32
    %c0_i32_0 = arith.constant 0 : i32
    %c0_i32_1 = arith.constant 0 : i32
    return %c0_i32, %c0_i32_0 : i32, i32
  }
  func.func @transform_2(%arg0: i32) -> (i32, i32) {
    %c0_i32 = arith.constant 0 : i32
    %c0_i32_0 = arith.constant 0 : i32
    %c0_i32_1 = arith.constant 0 : i32
    return %c0_i32, %c0_i32_0 : i32, i32
  }
  func.func @transform_3(%arg0: i32) -> (i32, i32, i32) {
    %c0_i32 = arith.constant 0 : i32
    %c0_i32_0 = arith.constant 0 : i32
    %c0_i32_1 = arith.constant 0 : i32
    %c0_i32_2 = arith.constant 0 : i32
    return %c0_i32, %c0_i32_0, %c0_i32_1 : i32, i32, i32
  }
  func.func @transform_4(%arg0: i32) -> (i32, i32) {
    %c0_i32 = arith.constant 0 : i32
    %c0_i32_0 = arith.constant 0 : i32
    %c0_i32_1 = arith.constant 0 : i32
    return %c0_i32, %c0_i32_0 : i32, i32
  }
  func.func @transform_5(%arg0: i32) -> (i32, i32) {
    %c0_i32 = arith.constant 0 : i32
    %c0_i32_0 = arith.constant 0 : i32
    return %arg0, %c0_i32 : i32, i32
  }
}

</mosaic_0001>

<llo_original>
// kernel: tpu_custom_call.1
$region0: #{tpu_custom_call.1}
  #allocation0 [shape = 'u32[]', space=smem, size = 0x4, offset = 0x4, fixed_abs, tag = 'smem constant byte address 0x4 - core index']
  #allocation1 [shape = 'u32[144,128]{1,0:T(1,128)}', space=vmem, size = 0x12000, scoped, tag = 'internal scratch']
  %s0 = inlined_call_operand.hbm [shape: f32[128,512], index: 0, kind: input, shape index: {}]
  %s1 = inlined_call_operand.hbm [shape: bf16[32,32], index: 1, kind: input, shape index: {}]
  %s2 = inlined_call_operand.vmem [shape: f32[1,32], index: 2, kind: input, shape index: {}]
  %s3 = inlined_call_operand.hbm [shape: bf16[4,32,128], index: 3, kind: input, shape index: {}]
  %s4 = inlined_call_operand.vmem [shape: f32[1,128], index: 4, kind: input, shape index: {}]
  %s5 = inlined_call_operand.hbm [shape: f32[128,128], index: 5, kind: output, shape index: {}]
  %s6 = sld [smem:[#allocation0]]
  $region65: #{tpu_custom_call.1} parent=0
    _
  %s8 = ssub.s32 1, %s6
  %s9 = scalar_select 0, %s8, %s6
  $region1: #{tpu_custom_call.1} parent=0
    #allocation2 [shape = 'u8[131072]{0}', space=vmem, size = 0x20000, scoped, tag = 'input window, operand 0']
    #allocation3 [shape = 's32[2]{0}', space=sflag, size = 0x8, scoped, tag = 'scoped memory for tpu_custom_call.1']
    #allocation4 [shape = 's32[2]{0}', space=sflag, size = 0x8, scoped, tag = 'scoped memory for tpu_custom_call.1']
    #allocation5 [shape = 'u8[8192]{0}', space=vmem, size = 0x2000, scoped, tag = 'input window, operand 1, single buffered']
    #allocation6 [shape = 's32[1]{0}', space=sflag, size = 0x4, scoped, tag = 'scoped memory for tpu_custom_call.1']
    #allocation7 [shape = 'u8[32768]{0}', space=vmem, size = 0x8000, scoped, tag = 'input window, operand 3, single buffered']
    #allocation8 [shape = 'u8[32768]{0}', space=vmem, size = 0x8000, scoped, tag = 'output window, operand 0']
    %10 = vsyncpa [#allocation3], 0
    %s11 = scalar_lea.sflag [#allocation3], 1
    %12 = vsyncpa %s11, 0
    %13 = vsyncpa [#allocation6], 0
    %14 = vsyncpa [#allocation4], 0
    %s15 = scalar_lea.sflag [#allocation4], 1
    %16 = vsyncpa %s15, 0
    loop: start=0, step=1, limit=6
    $region2: #{tpu_custom_call.1} parent=1 // loop_pre_header
      _
    $region3: #{tpu_custom_call.1} parent=1 // loop_header
      %s18 = sphi 0, %s22
      %p19 = scmp.ge.s32.totalorder %s18, 6
      %s28 = sphi 0, %s30
      %s31 = sphi 0, %s28
      %s32 = sphi 0, %s31
      %s48 = sphi 0, %s32
      %s52 = sphi 0, %s52
      %s54 = sphi 0, %s52
      %s55 = sphi 0, %s54
      %s69 = sphi 0, %s55
      %s73 = sphi 0, %s73
      %s75 = sphi 0, %s73
      %s76 = sphi 0, %s75
      %s90 = sphi 0, %s76
      %s94 = sphi 0, %s94
      %s96 = sphi 0, %s94
      %s97 = sphi 0, %s96
      %s111 = sphi 0, %s97
      %s115 = sphi 0, %s115
      %s117 = sphi 0, %s115
      %s118 = sphi 0, %s117
      %s132 = sphi 0, %s118
      %s138 = sphi 0, %s140
      %s141 = sphi 0, %s138
      %s142 = sphi 0, %s141
      %s158 = sphi 0, %s142
    $region4: #{tpu_custom_call.1} parent=1 // loop_header_branch
      %21 = sbr.rel (%p19) target = $region8
    $region5: #{tpu_custom_call.1} parent=1 // loop_body
      %s23 = ssub.s32 %s18, 1
      %s24 = ssub.s32 %s18, 2
      %s25 = sadd.s32 %s18, 1
      %s26 = ssub.s32 %s18, %s25
      %p27 = scmp.eq.s32.totalorder %s26, 0
      %s29 = sadd.s32 %s28, 1
      %s30 = scalar_select %p27, %s28, %s29
      %p33 = pneg %p27
      %p34 = scmp.eq.s32.totalorder %s18, 3
      %p35 = por %p33, %p34
      %p36 = scmp.ne.s32.totalorder %s28, %s31
      %p37 = scmp.eq.s32.totalorder %s18, 0
      %p38 = por %p36, %p37
      %p39 = scmp.ne.s32.totalorder %s28, %s31
      %p40 = scmp.eq.s32.totalorder %s23, 3
      %p41 = por %p39, %p40
      %p42 = scmp.ne.s32.totalorder %s31, %s32
      %p43 = scmp.eq.s32.totalorder %s23, 0
      %p44 = por %p42, %p43
      %p45 = scmp.ne.s32.totalorder %s31, %s32
      %p46 = scmp.eq.s32.totalorder %s24, 3
      %p47 = por %p45, %p46
      %p49 = scmp.ne.s32.totalorder %s32, %s48
      %p50 = scmp.eq.s32.totalorder %s24, 0
      %p51 = por %p49, %p50
      %s53 = sadd.s32 %s52, 1
      %p56 = scmp.eq.s32.totalorder %s18, 3
      %p57 = scmp.ne.s32.totalorder %s52, %s54
      %p58 = scmp.eq.s32.totalorder %s18, 0
      %p59 = por %p57, %p58
      %p60 = scmp.ne.s32.totalorder %s52, %s54
      %p61 = scmp.eq.s32.totalorder %s23, 3
      %p62 = por %p60, %p61
      %p63 = scmp.ne.s32.totalorder %s54, %s55
      %p64 = scmp.eq.s32.totalorder %s23, 0
      %p65 = por %p63, %p64
      %p66 = scmp.ne.s32.totalorder %s54, %s55
      %p67 = scmp.eq.s32.totalorder %s24, 3
      %p68 = por %p66, %p67
      %p70 = scmp.ne.s32.totalorder %s55, %s69
      %p71 = scmp.eq.s32.totalorder %s24, 0
      %p72 = por %p70, %p71
      %s74 = sadd.s32 %s73, 1
      %p77 = scmp.eq.s32.totalorder %s18, 3
      %p78 = scmp.ne.s32.totalorder %s73, %s75
      %p79 = scmp.eq.s32.totalorder %s18, 0
      %p80 = por %p78, %p79
      %p81 = scmp.ne.s32.totalorder %s73, %s75
      %p82 = scmp.eq.s32.totalorder %s23, 3
      %p83 = por %p81, %p82
      %p84 = scmp.ne.s32.totalorder %s75, %s76
      %p85 = scmp.eq.s32.totalorder %s23, 0
      %p86 = por %p84, %p85
      %p87 = scmp.ne.s32.totalorder %s75, %s76
      %p88 = scmp.eq.s32.totalorder %s24, 3
      %p89 = por %p87, %p88
      %p91 = scmp.ne.s32.totalorder %s76, %s90
      %p92 = scmp.eq.s32.totalorder %s24, 0
      %p93 = por %p91, %p92
      %s95 = sadd.s32 %s94, 1
      %p98 = scmp.eq.s32.totalorder %s18, 3
      %p99 = scmp.ne.s32.totalorder %s94, %s96
      %p100 = scmp.eq.s32.totalorder %s18, 0
      %p101 = por %p99, %p100
      %p102 = scmp.ne.s32.totalorder %s94, %s96
      %p103 = scmp.eq.s32.totalorder %s23, 3
      %p104 = por %p102, %p103
      %p105 = scmp.ne.s32.totalorder %s96, %s97
      %p106 = scmp.eq.s32.totalorder %s23, 0
      %p107 = por %p105, %p106
      %p108 = scmp.ne.s32.totalorder %s96, %s97
      %p109 = scmp.eq.s32.totalorder %s24, 3
      %p110 = por %p108, %p109
      %p112 = scmp.ne.s32.totalorder %s97, %s111
      %p113 = scmp.eq.s32.totalorder %s24, 0
      %p114 = por %p112, %p113
      %s116 = sadd.s32 %s115, 1
      %p119 = scmp.eq.s32.totalorder %s18, 3
      %p120 = scmp.ne.s32.totalorder %s115, %s117
      %p121 = scmp.eq.s32.totalorder %s18, 0
      %p122 = por %p120, %p121
      %p123 = scmp.ne.s32.totalorder %s115, %s117
      %p124 = scmp.eq.s32.totalorder %s23, 3
      %p125 = por %p123, %p124
      %p126 = scmp.ne.s32.totalorder %s117, %s118
      %p127 = scmp.eq.s32.totalorder %s23, 0
      %p128 = por %p126, %p127
      %p129 = scmp.ne.s32.totalorder %s117, %s118
      %p130 = scmp.eq.s32.totalorder %s24, 3
      %p131 = por %p129, %p130
      %p133 = scmp.ne.s32.totalorder %s118, %s132
      %p134 = scmp.eq.s32.totalorder %s24, 0
      %p135 = por %p133, %p134
      %s136 = ssub.s32 %s18, %s25
      %p137 = scmp.eq.s32.totalorder %s136, 0
      %s139 = sadd.s32 %s138, 1
      %s140 = scalar_select %p137, %s138, %s139
      %p143 = pneg %p137
      %p144 = scmp.eq.s32.totalorder %s18, 3
      %p145 = por %p143, %p144
      %p146 = scmp.ne.s32.totalorder %s138, %s141
      %p147 = scmp.eq.s32.totalorder %s18, 0
      %p148 = por %p146, %p147
      %p149 = scmp.ne.s32.totalorder %s138, %s141
      %p150 = scmp.eq.s32.totalorder %s23, 3
      %p151 = por %p149, %p150
      %p152 = scmp.ne.s32.totalorder %s141, %s142
      %p153 = scmp.eq.s32.totalorder %s23, 0
      %p154 = por %p152, %p153
      %p155 = scmp.ne.s32.totalorder %s141, %s142
      %p156 = scmp.eq.s32.totalorder %s24, 3
      %p157 = por %p155, %p156
      %p159 = scmp.ne.s32.totalorder %s142, %s158
      %p160 = scmp.eq.s32.totalorder %s24, 0
      %p161 = por %p159, %p160
      %p162 = scmp.le.s32.totalorder 1, %s18
      %p163 = scmp.lt.s32.totalorder %s18, 5
      %p164 = pnand %p162, %p163
      %p165 = pneg %p164
      // Predicated region
      $region9: #{tpu_custom_call.1} parent=5 // pred_check
        _
      $region10: #{tpu_custom_call.1} parent=5 // pred_check_branch
        %167 = sbr.rel (%p164) target = $region12
      $region11: #{tpu_custom_call.1} parent=5 // pred_region
        %s168 = ssub.s32 %s18, 1
        // Predicated region
        $region13: #{tpu_custom_call.1} parent=11 // pred_check
          %p169 = pneg %p65
        $region14: #{tpu_custom_call.1} parent=11 // pred_check_branch
          %171 = sbr.rel (%p169) target = $region16
        $region15: #{tpu_custom_call.1} parent=11 // pred_region
          %s173 = ssub.s32 256, 256
          %174 = vsyncadd [#allocation6], %s173
          %s175 = sshll.u32 [#allocation5], 4
          %s176 = int_to_ptr.vmem [resolvable:$true] %s175
          %181 = dma.hbm_to_vmem [thread:$0]  %s1, 256, %s176, [#allocation6], 64, 64, 4
        $region16: #{tpu_custom_call.1} parent=11 // pred_fallthru
          _
        // Predicated region
        $region17: #{tpu_custom_call.1} parent=11 // pred_check
          %p182 = pneg %p86
        $region18: #{tpu_custom_call.1} parent=11 // pred_check_branch
          %184 = sbr.rel (%p182) target = $region20
        $region19: #{tpu_custom_call.1} parent=11 // pred_region
          _
        $region20: #{tpu_custom_call.1} parent=11 // pred_fallthru
          _
        // Predicated region
        $region21: #{tpu_custom_call.1} parent=11 // pred_check
          %p185 = pneg %p107
        $region22: #{tpu_custom_call.1} parent=11 // pred_check_branch
          %187 = sbr.rel (%p185) target = $region24
        $region23: #{tpu_custom_call.1} parent=11 // pred_region
          %s189 = ssub.s32 1024, 1024
          %190 = vsyncadd [#allocation6], %s189
          %s191 = sshll.u32 [#allocation7], 4
          %s192 = int_to_ptr.vmem [resolvable:$true] %s191
          %197 = dma.hbm_to_vmem [thread:$0]  %s3, 1024, %s192, [#allocation6], 64, 64, 4
        $region24: #{tpu_custom_call.1} parent=11 // pred_fallthru
          _
        // Predicated region
        $region25: #{tpu_custom_call.1} parent=11 // pred_check
          %p198 = pneg %p128
        $region26: #{tpu_custom_call.1} parent=11 // pred_check_branch
          %200 = sbr.rel (%p198) target = $region28
        $region27: #{tpu_custom_call.1} parent=11 // pred_region
          _
        $region28: #{tpu_custom_call.1} parent=11 // pred_fallthru
          _
      $region12: #{tpu_custom_call.1} parent=5 // pred_fallthru
        _
      %p201 = scmp.lt.s32.totalorder %s18, 4
      // Predicated region
      $region29: #{tpu_custom_call.1} parent=5 // pred_check
        %p202 = pneg %p201
      $region30: #{tpu_custom_call.1} parent=5 // pred_check_branch
        %204 = sbr.rel (%p202) target = $region32
      $region31: #{tpu_custom_call.1} parent=5 // pred_region
        // Predicated region
        $region33: #{tpu_custom_call.1} parent=31 // pred_check
          %p205 = pneg %p38
        $region34: #{tpu_custom_call.1} parent=31 // pred_check_branch
          %207 = sbr.rel (%p205) target = $region36
        $region35: #{tpu_custom_call.1} parent=31 // pred_region
          %s208 = sand.u32 %s28, 1
          %s209 = scalar_lea.sflag [#allocation3], %s208
          %s210 = sand.u32 %s28, 1
          %s211 = smul.addr %s210, 128
          %s212 = scalar_lea.vmem [#allocation2], %s211
          %s213 = smul.u32 4, %s18
          %s215 = ssub.s32 2048, 2048
          %216 = vsyncadd %s209, %s215
          %s217 = smul.addr %s213, 4
          %s218 = smul.addr %s217, 128
          %s219 = scalar_lea.hbm %s0, %s218
          %s220 = sshll.u32 %s212, 4
          %s221 = int_to_ptr.vmem [resolvable:$true] %s220
          %226 = dma.hbm_to_vmem [thread:$0]  %s219, 2048, %s221, %s209, 512, 512, 32
        $region36: #{tpu_custom_call.1} parent=31 // pred_fallthru
          _
      $region32: #{tpu_custom_call.1} parent=5 // pred_fallthru
        _
      %p227 = scmp.le.s32.totalorder 1, %s18
      %p228 = scmp.lt.s32.totalorder %s18, 5
      %p229 = pnand %p227, %p228
      %p230 = pneg %p229
      // Predicated region
      $region37: #{tpu_custom_call.1} parent=5 // pred_check
        _
      $region38: #{tpu_custom_call.1} parent=5 // pred_check_branch
        %232 = sbr.rel (%p229) target = $region40
      $region39: #{tpu_custom_call.1} parent=5 // pred_region
        %s233 = ssub.s32 %s18, 1
        %s234 = sand.u32 %s31, 1
        %s235 = scalar_lea.sflag [#allocation3], %s234
        %s236 = sand.u32 %s31, 1
        %s237 = smul.addr %s236, 128
        %s238 = scalar_lea.vmem [#allocation2], %s237
        // Predicated region
        $region41: #{tpu_custom_call.1} parent=39 // pred_check
          %p239 = pneg %p44
        $region42: #{tpu_custom_call.1} parent=39 // pred_check_branch
          %241 = sbr.rel (%p239) target = $region44
        $region43: #{tpu_custom_call.1} parent=39 // pred_region
          %242 = dma.done %s235, 2048
        $region44: #{tpu_custom_call.1} parent=39 // pred_fallthru
          _
        // Predicated region
        $region45: #{tpu_custom_call.1} parent=39 // pred_check
          %p243 = pneg %p65
        $region46: #{tpu_custom_call.1} parent=39 // pred_check_branch
          %245 = sbr.rel (%p243) target = $region48
        $region47: #{tpu_custom_call.1} parent=39 // pred_region
          %246 = dma.done [#allocation6], 256
        $region48: #{tpu_custom_call.1} parent=39 // pred_fallthru
          _
        // Predicated region
        $region49: #{tpu_custom_call.1} parent=39 // pred_check
          %p247 = pneg %p107
        $region50: #{tpu_custom_call.1} parent=39 // pred_check_branch
          %249 = sbr.rel (%p247) target = $region52
        $region51: #{tpu_custom_call.1} parent=39 // pred_region
          %250 = dma.done [#allocation6], 1024
        $region52: #{tpu_custom_call.1} parent=39 // pred_fallthru
          _
        %s251 = sand.u32 %s31, 1
        %s252 = scalar_lea.sflag [#allocation3], %s251
        %s253 = sand.u32 %s31, 1
        %s254 = smul.addr %s253, 128
        %s255 = scalar_lea.vmem [#allocation2], %s254
        %p256 = pneg %p44
        %p257 = pneg %p41
        %p258 = pneg %p65
        %p259 = pneg %p62
        %p260 = pneg %p86
        %p261 = pneg %p83
        %p262 = pneg %p107
        %p263 = pneg %p104
        %p264 = pneg %p128
        %p265 = pneg %p125
        %p266 = pneg %p154
        %p267 = pneg %p151
        %s268 = sand.u32 %s141, 1
        %s269 = scalar_lea.sflag [#allocation4], %s268
        %s270 = sand.u32 %s141, 1
        %s271 = smul.addr %s270, 32
        %s272 = scalar_lea.vmem [#allocation8], %s271
        %s273 = smul.u32 4, %s23
        %s274 = smul.u32 4, %s23
        %v276 = vld [vmem:[%s238] sm:$0xff]
        %v277 = vld [vmem:[%s238 + $0x20] sm:$0xff]
        %v278 = vld [vmem:[%s238 + $0x40] sm:$0xff]
        %v279 = vld [vmem:[%s238 + $0x60] sm:$0xff]
        %v280 = vpack.c.bf16 %v277, %v276
        %v281 = vpack.c.bf16 %v279, %v278
        %v282 = vld [vmem:[#allocation5] sm:$0xf]
        %v283 = vld [vmem:[#allocation5 + $0x4] sm:$0xf]
        %v284 = vld [vmem:[#allocation5 + $0x8] sm:$0xf]
        %v285 = vld [vmem:[#allocation5 + $0xc] sm:$0xf]
        %v286 = vld [vmem:[%s2] sm:$0x1]
        %v288 = vlaneseq
        %v289 = vshrl.u32 %v288, 7
        %v290 = vsub.s32 0, %v289
        %v291 = vrot.slane %v286, %v290
        %v297 = vunpack.c.l.b16 %v282
        %v298 = vunpack.c.l.b16 %v283
        %v299 = vunpack.c.l.b16 %v284
        %v300 = vunpack.c.l.b16 %v285
        %v301 = vpack.c.b16 %v298, %v297
        %v302 = vpack.c.b16 %v300, %v299
        %vm305 = vcmask 261120
        %v307 = vsel %vm305, %v280, 0
        %v310 = vsel %vm305, %v281, 0
        %312 = vmatprep.subr.bf16.mxu0 0
        %313 = vmatpush1.bf16.msra.mxu0 %v301
        %314 = vmatprep.subr.bf16.mxu0 0
        %315 = vmatpush1.bf16.msra.mxu0 %v302
        %316 = vmatprep.subr.bf16.mxu0 0
        %317 = vmatpush1.bf16.msra.mxu0 0
        %318 = vmatprep.subr.bf16.mxu0 0
        %319 = vmatpush1.bf16.msra.mxu0 0
        %320 = vmatprep.subr.bf16.mxu0 0
        %321 = vmatpush1.bf16.msra.mxu0 0
        %322 = vmatprep.subr.bf16.mxu0 0
        %323 = vmatpush1.bf16.msra.mxu0 0
        %324 = vmatprep.subr.bf16.mxu0 0
        %325 = vmatpush1.bf16.msra.mxu0 0
        %326 = vmatprep.subr.bf16.mxu0 0
        %327 = vmatpush1.bf16.msra.mxu0 0
        %328 = vmatprep.subr.bf16.mxu0 0
        %329 = vmatpush1.bf16.msra.mxu0 0
        %330 = vmatprep.subr.bf16.mxu0 0
        %331 = vmatpush1.bf16.msra.mxu0 0
        %332 = vmatprep.subr.bf16.mxu0 0
        %333 = vmatpush1.bf16.msra.mxu0 0
        %334 = vmatprep.subr.bf16.mxu0 0
        %335 = vmatpush1.bf16.msra.mxu0 0
        %336 = vmatprep.subr.bf16.mxu0 0
        %337 = vmatpush1.bf16.msra.mxu0 0
        %338 = vmatprep.subr.bf16.mxu0 0
        %339 = vmatpush1.bf16.msra.mxu0 0
        %340 = vmatprep.subr.bf16.mxu0 0
        %341 = vmatpush1.bf16.msra.mxu0 0
        %342 = vmatprep.subr.bf16.mxu0 0
        %343 = vmatpush1.bf16.msra.mxu0 0
        %344 = vmatprep.mubr.bf16.mxu0 0
        %345 = vmatmul.mubr.bf16.gmra.mrb[0].mxu0 %v307
        %v346 = vpop.f32.mrb[0].mxu0
        %v347 = vadd.f32 %v291, %v346
        %v348 = vpop.f32.mrb[0].mxu0
        %v349 = vpop.f32.mrb[0].mxu0
        %v350 = vadd.f32 %v291, %v349
        %v351 = vpop.f32.mrb[0].mxu0
        %352 = vmatprep.mubr.bf16.mxu0 0
        %353 = vmatmul.mubr.bf16.gmra.mrb[0].mxu0 %v310
        %v354 = vpop.f32.mrb[0].mxu0
        %v355 = vadd.f32 %v291, %v354
        %v356 = vpop.f32.mrb[0].mxu0
        %v357 = vpop.f32.mrb[0].mxu0
        %v358 = vadd.f32 %v291, %v357
        %v359 = vpop.f32.mrb[0].mxu0
        %360 = vdwg.mxu0
        %v361 = vmax.f32 %v347, 0.0
        %v362 = vmax.f32 %v350, 0.0
        %v363 = vmax.f32 %v355, 0.0
        %v364 = vmax.f32 %v358, 0.0
        %367 = vrot.lane.b32.xlu0 %v280, 96
        %v368 = vpop.permute.xlu0 %367
        %369 = vrot.lane.b32.xlu0 %v281, 96
        %v370 = vpop.permute.xlu0 %369
        %v372 = vsel %vm305, %v368, 0
        %v375 = vsel %vm305, %v370, 0
        %377 = vmatprep.subr.bf16.mxu0 0
        %378 = vmatpush1.bf16.msra.mxu0 %v301
        %379 = vmatprep.subr.bf16.mxu0 0
        %380 = vmatpush1.bf16.msra.mxu0 %v302
        %381 = vmatprep.subr.bf16.mxu0 0
        %382 = vmatpush1.bf16.msra.mxu0 0
        %383 = vmatprep.subr.bf16.mxu0 0
        %384 = vmatpush1.bf16.msra.mxu0 0
        %385 = vmatprep.subr.bf16.mxu0 0
        %386 = vmatpush1.bf16.msra.mxu0 0
        %387 = vmatprep.subr.bf16.mxu0 0
        %388 = vmatpush1.bf16.msra.mxu0 0
        %389 = vmatprep.subr.bf16.mxu0 0
        %390 = vmatpush1.bf16.msra.mxu0 0
        %391 = vmatprep.subr.bf16.mxu0 0
        %392 = vmatpush1.bf16.msra.mxu0 0
        %393 = vmatprep.subr.bf16.mxu0 0
        %394 = vmatpush1.bf16.msra.mxu0 0
        %395 = vmatprep.subr.bf16.mxu0 0
        %396 = vmatpush1.bf16.msra.mxu0 0
        %397 = vmatprep.subr.bf16.mxu0 0
        %398 = vmatpush1.bf16.msra.mxu0 0
        %399 = vmatprep.subr.bf16.mxu0 0
        %400 = vmatpush1.bf16.msra.mxu0 0
        %401 = vmatprep.subr.bf16.mxu0 0
        %402 = vmatpush1.bf16.msra.mxu0 0
        %403 = vmatprep.subr.bf16.mxu0 0
        %404 = vmatpush1.bf16.msra.mxu0 0
        %405 = vmatprep.subr.bf16.mxu0 0
        %406 = vmatpush1.bf16.msra.mxu0 0
        %407 = vmatprep.subr.bf16.mxu0 0
        %408 = vmatpush1.bf16.msra.mxu0 0
        %409 = vmatprep.mubr.bf16.mxu0 0
        %410 = vmatmul.mubr.bf16.gmra.mrb[0].mxu0 %v372
        %v411 = vpop.f32.mrb[0].mxu0
        %v412 = vadd.f32 %v291, %v411
        %v413 = vpop.f32.mrb[0].mxu0
        %v414 = vpop.f32.mrb[0].mxu0
        %v415 = vadd.f32 %v291, %v414
        %v416 = vpop.f32.mrb[0].mxu0
        %417 = vmatprep.mubr.bf16.mxu0 0
        %418 = vmatmul.mubr.bf16.gmra.mrb[0].mxu0 %v375
        %v419 = vpop.f32.mrb[0].mxu0
        %v420 = vadd.f32 %v291, %v419
        %v421 = vpop.f32.mrb[0].mxu0
        %v422 = vpop.f32.mrb[0].mxu0
        %v423 = vadd.f32 %v291, %v422
        %v424 = vpop.f32.mrb[0].mxu0
        %425 = vdwg.mxu0
        %v426 = vmax.f32 %v412, 0.0
        %v427 = vmax.f32 %v415, 0.0
        %v428 = vmax.f32 %v420, 0.0
        %v429 = vmax.f32 %v423, 0.0
        %v430 = vadd.f32 %v361, %v426
        %v431 = vadd.f32 %v362, %v427
        %v432 = vadd.f32 %v363, %v428
        %v433 = vadd.f32 %v364, %v429
        %434 = vrot.lane.b32.xlu0 %v280, 64
        %v435 = vpop.permute.xlu0 %434
        %436 = vrot.lane.b32.xlu0 %v281, 64
        %v437 = vpop.permute.xlu0 %436
        %v439 = vsel %vm305, %v435, 0
        %v442 = vsel %vm305, %v437, 0
        %444 = vmatprep.subr.bf16.mxu0 0
        %445 = vmatpush1.bf16.msra.mxu0 %v301
        %446 = vmatprep.subr.bf16.mxu0 0
        %447 = vmatpush1.bf16.msra.mxu0 %v302
        %448 = vmatprep.subr.bf16.mxu0 0
        %449 = vmatpush1.bf16.msra.mxu0 0
        %450 = vmatprep.subr.bf16.mxu0 0
        %451 = vmatpush1.bf16.msra.mxu0 0
        %452 = vmatprep.subr.bf16.mxu0 0
        %453 = vmatpush1.bf16.msra.mxu0 0
        %454 = vmatprep.subr.bf16.mxu0 0
        %455 = vmatpush1.bf16.msra.mxu0 0
        %456 = vmatprep.subr.bf16.mxu0 0
        %457 = vmatpush1.bf16.msra.mxu0 0
        %458 = vmatprep.subr.bf16.mxu0 0
        %459 = vmatpush1.bf16.msra.mxu0 0
        %460 = vmatprep.subr.bf16.mxu0 0
        %461 = vmatpush1.bf16.msra.mxu0 0
        %462 = vmatprep.subr.bf16.mxu0 0
        %463 = vmatpush1.bf16.msra.mxu0 0
        %464 = vmatprep.subr.bf16.mxu0 0
        %465 = vmatpush1.bf16.msra.mxu0 0
        %466 = vmatprep.subr.bf16.mxu0 0
        %467 = vmatpush1.bf16.msra.mxu0 0
        %468 = vmatprep.subr.bf16.mxu0 0
        %469 = vmatpush1.bf16.msra.mxu0 0
        %470 = vmatprep.subr.bf16.mxu0 0
        %471 = vmatpush1.bf16.msra.mxu0 0
        %472 = vmatprep.subr.bf16.mxu0 0
        %473 = vmatpush1.bf16.msra.mxu0 0
        %474 = vmatprep.subr.bf16.mxu0 0
        %475 = vmatpush1.bf16.msra.mxu0 0
        %476 = vmatprep.mubr.bf16.mxu0 0
        %477 = vmatmul.mubr.bf16.gmra.mrb[0].mxu0 %v439
        %v478 = vpop.f32.mrb[0].mxu0
        %v479 = vadd.f32 %v291, %v478
        %v480 = vpop.f32.mrb[0].mxu0
        %v481 = vpop.f32.mrb[0].mxu0
        %v482 = vadd.f32 %v291, %v481
        %v483 = vpop.f32.mrb[0].mxu0
        %484 = vmatprep.mubr.bf16.mxu0 0
        %485 = vmatmul.mubr.bf16.gmra.mrb[0].mxu0 %v442
        %v486 = vpop.f32.mrb[0].mxu0
        %v487 = vadd.f32 %v291, %v486
        %v488 = vpop.f32.mrb[0].mxu0
        %v489 = vpop.f32.mrb[0].mxu0
        %v490 = vadd.f32 %v291, %v489
        %v491 = vpop.f32.mrb[0].mxu0
        %492 = vdwg.mxu0
        %v493 = vmax.f32 %v479, 0.0
        %v494 = vmax.f32 %v482, 0.0
        %v495 = vmax.f32 %v487, 0.0
        %v496 = vmax.f32 %v490, 0.0
        %v497 = vadd.f32 %v430, %v493
        %v498 = vadd.f32 %v431, %v494
        %v499 = vadd.f32 %v432, %v495
        %v500 = vadd.f32 %v433, %v496
        %501 = vrot.lane.b32.xlu0 %v280, 32
        %v502 = vpop.permute.xlu0 %501
        %503 = vrot.lane.b32.xlu0 %v281, 32
        %v504 = vpop.permute.xlu0 %503
        %v506 = vsel %vm305, %v502, 0
        %v509 = vsel %vm305, %v504, 0
        %511 = vmatprep.subr.bf16.mxu0 0
        %512 = vmatpush1.bf16.msra.mxu0 %v301
        %513 = vmatprep.subr.bf16.mxu0 0
        %514 = vmatpush1.bf16.msra.mxu0 %v302
        %515 = vmatprep.subr.bf16.mxu0 0
        %516 = vmatpush1.bf16.msra.mxu0 0
        %517 = vmatprep.subr.bf16.mxu0 0
        %518 = vmatpush1.bf16.msra.mxu0 0
        %519 = vmatprep.subr.bf16.mxu0 0
        %520 = vmatpush1.bf16.msra.mxu0 0
        %521 = vmatprep.subr.bf16.mxu0 0
        %522 = vmatpush1.bf16.msra.mxu0 0
        %523 = vmatprep.subr.bf16.mxu0 0
        %524 = vmatpush1.bf16.msra.mxu0 0
        %525 = vmatprep.subr.bf16.mxu0 0
        %526 = vmatpush1.bf16.msra.mxu0 0
        %527 = vmatprep.subr.bf16.mxu0 0
        %528 = vmatpush1.bf16.msra.mxu0 0
        %529 = vmatprep.subr.bf16.mxu0 0
        %530 = vmatpush1.bf16.msra.mxu0 0
        %531 = vmatprep.subr.bf16.mxu0 0
        %532 = vmatpush1.bf16.msra.mxu0 0
        %533 = vmatprep.subr.bf16.mxu0 0
        %534 = vmatpush1.bf16.msra.mxu0 0
        %535 = vmatprep.subr.bf16.mxu0 0
        %536 = vmatpush1.bf16.msra.mxu0 0
        %537 = vmatprep.subr.bf16.mxu0 0
        %538 = vmatpush1.bf16.msra.mxu0 0
        %539 = vmatprep.subr.bf16.mxu0 0
        %540 = vmatpush1.bf16.msra.mxu0 0
        %541 = vmatprep.subr.bf16.mxu0 0
        %542 = vmatpush1.bf16.msra.mxu0 0
        %543 = vmatprep.mubr.bf16.mxu0 0
        %544 = vmatmul.mubr.bf16.gmra.mrb[0].mxu0 %v506
        %v545 = vpop.f32.mrb[0].mxu0
        %v546 = vadd.f32 %v291, %v545
        %v547 = vpop.f32.mrb[0].mxu0
        %v548 = vpop.f32.mrb[0].mxu0
        %v549 = vadd.f32 %v291, %v548
        %v550 = vpop.f32.mrb[0].mxu0
        %551 = vmatprep.mubr.bf16.mxu0 0
        %552 = vmatmul.mubr.bf16.gmra.mrb[0].mxu0 %v509
        %v553 = vpop.f32.mrb[0].mxu0
        %v554 = vadd.f32 %v291, %v553
        %v555 = vpop.f32.mrb[0].mxu0
        %v556 = vpop.f32.mrb[0].mxu0
        %v557 = vadd.f32 %v291, %v556
        %v558 = vpop.f32.mrb[0].mxu0
        %559 = vdwg.mxu0
        %v560 = vmax.f32 %v546, 0.0
        %v561 = vmax.f32 %v549, 0.0
        %v562 = vmax.f32 %v554, 0.0
        %v563 = vmax.f32 %v557, 0.0
        %v564 = vadd.f32 %v497, %v560
        %v565 = vadd.f32 %v498, %v561
        %v566 = vadd.f32 %v499, %v562
        %v567 = vadd.f32 %v500, %v563
        %v568 = vmul.f32 %v564, 0.25
        %v569 = vmul.f32 %v565, 0.25
        %v570 = vmul.f32 %v566, 0.25
        %v571 = vmul.f32 %v567, 0.25
        %v572 = vpack.c.bf16 %v569, %v568
        %v573 = vpack.c.bf16 %v571, %v570
        %v574 = vld [vmem:[#allocation7] sm:$0xf]
        %v575 = vld [vmem:[#allocation7 + $0x4] sm:$0xf]
        %v576 = vld [vmem:[#allocation7 + $0x8] sm:$0xf]
        %v577 = vld [vmem:[#allocation7 + $0xc] sm:$0xf]
        %v578 = vld [vmem:[%s238 + $0x8] sm:$0xff]
        %v579 = vld [vmem:[%s238 + $0x28] sm:$0xff]
        %v580 = vld [vmem:[%s238 + $0x48] sm:$0xff]
        %v581 = vld [vmem:[%s238 + $0x68] sm:$0xff]
        %v582 = vpack.c.bf16 %v579, %v578
        %v583 = vpack.c.bf16 %v581, %v580
        %v585 = vsel %vm305, %v582, 0
        %v588 = vsel %vm305, %v583, 0
        %590 = vmatprep.subr.bf16.mxu0 0
        %591 = vmatpush1.bf16.msra.mxu0 %v301
        %592 = vmatprep.subr.bf16.mxu0 0
        %593 = vmatpush1.bf16.msra.mxu0 %v302
        %594 = vmatprep.subr.bf16.mxu0 0
        %595 = vmatpush1.bf16.msra.mxu0 0
        %596 = vmatprep.subr.bf16.mxu0 0
        %597 = vmatpush1.bf16.msra.mxu0 0
        %598 = vmatprep.subr.bf16.mxu0 0
        %599 = vmatpush1.bf16.msra.mxu0 0
        %600 = vmatprep.subr.bf16.mxu0 0
        %601 = vmatpush1.bf16.msra.mxu0 0
        %602 = vmatprep.subr.bf16.mxu0 0
        %603 = vmatpush1.bf16.msra.mxu0 0
        %604 = vmatprep.subr.bf16.mxu0 0
        %605 = vmatpush1.bf16.msra.mxu0 0
        %606 = vmatprep.subr.bf16.mxu0 0
        %607 = vmatpush1.bf16.msra.mxu0 0
        %608 = vmatprep.subr.bf16.mxu0 0
        %609 = vmatpush1.bf16.msra.mxu0 0
        %610 = vmatprep.subr.bf16.mxu0 0
        %611 = vmatpush1.bf16.msra.mxu0 0
        %612 = vmatprep.subr.bf16.mxu0 0
        %613 = vmatpush1.bf16.msra.mxu0 0
        %614 = vmatprep.subr.bf16.mxu0 0
        %615 = vmatpush1.bf16.msra.mxu0 0
        %616 = vmatprep.subr.bf16.mxu0 0
        %617 = vmatpush1.bf16.msra.mxu0 0
        %618 = vmatprep.subr.bf16.mxu0 0
        %619 = vmatpush1.bf16.msra.mxu0 0
        %620 = vmatprep.subr.bf16.mxu0 0
        %621 = vmatpush1.bf16.msra.mxu0 0
        %622 = vmatprep.mubr.bf16.mxu0 0
        %623 = vmatmul.mubr.bf16.gmra.mrb[0].mxu0 %v585
        %v624 = vpop.f32.mrb[0].mxu0
        %v625 = vadd.f32 %v291, %v624
        %v626 = vpop.f32.mrb[0].mxu0
        %v627 = vpop.f32.mrb[0].mxu0
        %v628 = vadd.f32 %v291, %v627
        %v629 = vpop.f32.mrb[0].mxu0
        %630 = vmatprep.mubr.bf16.mxu0 0
        %631 = vmatmul.mubr.bf16.gmra.mrb[0].mxu0 %v588
        %v632 = vpop.f32.mrb[0].mxu0
        %v633 = vadd.f32 %v291, %v632
        %v634 = vpop.f32.mrb[0].mxu0
        %v635 = vpop.f32.mrb[0].mxu0
        %v636 = vadd.f32 %v291, %v635
        %v637 = vpop.f32.mrb[0].mxu0
        %638 = vdwg.mxu0
        %v639 = vmax.f32 %v625, 0.0
        %v640 = vmax.f32 %v628, 0.0
        %v641 = vmax.f32 %v633, 0.0
        %v642 = vmax.f32 %v636, 0.0
        %645 = vrot.lane.b32.xlu0 %v582, 96
        %v646 = vpop.permute.xlu0 %645
        %647 = vrot.lane.b32.xlu0 %v583, 96
        %v648 = vpop.permute.xlu0 %647
        %v650 = vsel %vm305, %v646, 0
        %v653 = vsel %vm305, %v648, 0
        %655 = vmatprep.subr.bf16.mxu0 0
        %656 = vmatpush1.bf16.msra.mxu0 %v301
        %657 = vmatprep.subr.bf16.mxu0 0
        %658 = vmatpush1.bf16.msra.mxu0 %v302
        %659 = vmatprep.subr.bf16.mxu0 0
        %660 = vmatpush1.bf16.msra.mxu0 0
        %661 = vmatprep.subr.bf16.mxu0 0
        %662 = vmatpush1.bf16.msra.mxu0 0
        %663 = vmatprep.subr.bf16.mxu0 0
        %664 = vmatpush1.bf16.msra.mxu0 0
        %665 = vmatprep.subr.bf16.mxu0 0
        %666 = vmatpush1.bf16.msra.mxu0 0
        %667 = vmatprep.subr.bf16.mxu0 0
        %668 = vmatpush1.bf16.msra.mxu0 0
        %669 = vmatprep.subr.bf16.mxu0 0
        %670 = vmatpush1.bf16.msra.mxu0 0
        %671 = vmatprep.subr.bf16.mxu0 0
        %672 = vmatpush1.bf16.msra.mxu0 0
        %673 = vmatprep.subr.bf16.mxu0 0
        %674 = vmatpush1.bf16.msra.mxu0 0
        %675 = vmatprep.subr.bf16.mxu0 0
        %676 = vmatpush1.bf16.msra.mxu0 0
        %677 = vmatprep.subr.bf16.mxu0 0
        %678 = vmatpush1.bf16.msra.mxu0 0
        %679 = vmatprep.subr.bf16.mxu0 0
        %680 = vmatpush1.bf16.msra.mxu0 0
        %681 = vmatprep.subr.bf16.mxu0 0
        %682 = vmatpush1.bf16.msra.mxu0 0
        %683 = vmatprep.subr.bf16.mxu0 0
        %684 = vmatpush1.bf16.msra.mxu0 0
        %685 = vmatprep.subr.bf16.mxu0 0
        %686 = vmatpush1.bf16.msra.mxu0 0
        %687 = vmatprep.mubr.bf16.mxu0 0
        %688 = vmatmul.mubr.bf16.gmra.mrb[0].mxu0 %v650
        %v689 = vpop.f32.mrb[0].mxu0
        %v690 = vadd.f32 %v291, %v689
        %v691 = vpop.f32.mrb[0].mxu0
        %v692 = vpop.f32.mrb[0].mxu0
        %v693 = vadd.f32 %v291, %v692
        %v694 = vpop.f32.mrb[0].mxu0
        %695 = vmatprep.mubr.bf16.mxu0 0
        %696 = vmatmul.mubr.bf16.gmra.mrb[0].mxu0 %v653
        %v697 = vpop.f32.mrb[0].mxu0
        %v698 = vadd.f32 %v291, %v697
        %v699 = vpop.f32.mrb[0].mxu0
        %v700 = vpop.f32.mrb[0].mxu0
        %v701 = vadd.f32 %v291, %v700
        %v702 = vpop.f32.mrb[0].mxu0
        %703 = vdwg.mxu0
        %v704 = vmax.f32 %v690, 0.0
        %v705 = vmax.f32 %v693, 0.0
        %v706 = vmax.f32 %v698, 0.0
        %v707 = vmax.f32 %v701, 0.0
        %v708 = vadd.f32 %v639, %v704
        %v709 = vadd.f32 %v640, %v705
        %v710 = vadd.f32 %v641, %v706
        %v711 = vadd.f32 %v642, %v707
        %712 = vrot.lane.b32.xlu0 %v582, 64
        %v713 = vpop.permute.xlu0 %712
        %714 = vrot.lane.b32.xlu0 %v583, 64
        %v715 = vpop.permute.xlu0 %714
        %v717 = vsel %vm305, %v713, 0
        %v720 = vsel %vm305, %v715, 0
        %722 = vmatprep.subr.bf16.mxu0 0
        %723 = vmatpush1.bf16.msra.mxu0 %v301
        %724 = vmatprep.subr.bf16.mxu0 0
        %725 = vmatpush1.bf16.msra.mxu0 %v302
        %726 = vmatprep.subr.bf16.mxu0 0
        %727 = vmatpush1.bf16.msra.mxu0 0
        %728 = vmatprep.subr.bf16.mxu0 0
        %729 = vmatpush1.bf16.msra.mxu0 0
        %730 = vmatprep.subr.bf16.mxu0 0
        %731 = vmatpush1.bf16.msra.mxu0 0
        %732 = vmatprep.subr.bf16.mxu0 0
        %733 = vmatpush1.bf16.msra.mxu0 0
        %734 = vmatprep.subr.bf16.mxu0 0
        %735 = vmatpush1.bf16.msra.mxu0 0
        %736 = vmatprep.subr.bf16.mxu0 0
        %737 = vmatpush1.bf16.msra.mxu0 0
        %738 = vmatprep.subr.bf16.mxu0 0
        %739 = vmatpush1.bf16.msra.mxu0 0
        %740 = vmatprep.subr.bf16.mxu0 0
        %741 = vmatpush1.bf16.msra.mxu0 0
        %742 = vmatprep.subr.bf16.mxu0 0
        %743 = vmatpush1.bf16.msra.mxu0 0
        %744 = vmatprep.subr.bf16.mxu0 0
        %745 = vmatpush1.bf16.msra.mxu0 0
        %746 = vmatprep.subr.bf16.mxu0 0
        %747 = vmatpush1.bf16.msra.mxu0 0
        %748 = vmatprep.subr.bf16.mxu0 0
        %749 = vmatpush1.bf16.msra.mxu0 0
        %750 = vmatprep.subr.bf16.mxu0 0
        %751 = vmatpush1.bf16.msra.mxu0 0
        %752 = vmatprep.subr.bf16.mxu0 0
        %753 = vmatpush1.bf16.msra.mxu0 0
        %754 = vmatprep.mubr.bf16.mxu0 0
        %755 = vmatmul.mubr.bf16.gmra.mrb[0].mxu0 %v717
        %v756 = vpop.f32.mrb[0].mxu0
        %v757 = vadd.f32 %v291, %v756
        %v758 = vpop.f32.mrb[0].mxu0
        %v759 = vpop.f32.mrb[0].mxu0
        %v760 = vadd.f32 %v291, %v759
        %v761 = vpop.f32.mrb[0].mxu0
        %762 = vmatprep.mubr.bf16.mxu0 0
        %763 = vmatmul.mubr.bf16.gmra.mrb[0].mxu0 %v720
        %v764 = vpop.f32.mrb[0].mxu0
        %v765 = vadd.f32 %v291, %v764
        %v766 = vpop.f32.mrb[0].mxu0
        %v767 = vpop.f32.mrb[0].mxu0
        %v768 = vadd.f32 %v291, %v767
        %v769 = vpop.f32.mrb[0].mxu0
        %770 = vdwg.mxu0
        %v771 = vmax.f32 %v757, 0.0
        %v772 = vmax.f32 %v760, 0.0
        %v773 = vmax.f32 %v765, 0.0
        %v774 = vmax.f32 %v768, 0.0
        %v775 = vadd.f32 %v708, %v771
        %v776 = vadd.f32 %v709, %v772
        %v777 = vadd.f32 %v710, %v773
        %v778 = vadd.f32 %v711, %v774
        %779 = vrot.lane.b32.xlu0 %v582, 32
        %v780 = vpop.permute.xlu0 %779
        %781 = vrot.lane.b32.xlu0 %v583, 32
        %v782 = vpop.permute.xlu0 %781
        %v784 = vsel %vm305, %v780, 0
        %v787 = vsel %vm305, %v782, 0
        %789 = vmatprep.subr.bf16.mxu0 0
        %790 = vmatpush1.bf16.msra.mxu0 %v301
        %791 = vmatprep.subr.bf16.mxu0 0
        %792 = vmatpush1.bf16.msra.mxu0 %v302
        %793 = vmatprep.subr.bf16.mxu0 0
        %794 = vmatpush1.bf16.msra.mxu0 0
        %795 = vmatprep.subr.bf16.mxu0 0
        %796 = vmatpush1.bf16.msra.mxu0 0
        %797 = vmatprep.subr.bf16.mxu0 0
        %798 = vmatpush1.bf16.msra.mxu0 0
        %799 = vmatprep.subr.bf16.mxu0 0
        %800 = vmatpush1.bf16.msra.mxu0 0
        %801 = vmatprep.subr.bf16.mxu0 0
        %802 = vmatpush1.bf16.msra.mxu0 0
        %803 = vmatprep.subr.bf16.mxu0 0
        %804 = vmatpush1.bf16.msra.mxu0 0
        %805 = vmatprep.subr.bf16.mxu0 0
        %806 = vmatpush1.bf16.msra.mxu0 0
        %807 = vmatprep.subr.bf16.mxu0 0
        %808 = vmatpush1.bf16.msra.mxu0 0
        %809 = vmatprep.subr.bf16.mxu0 0
        %810 = vmatpush1.bf16.msra.mxu0 0
        %811 = vmatprep.subr.bf16.mxu0 0
        %812 = vmatpush1.bf16.msra.mxu0 0
        %813 = vmatprep.subr.bf16.mxu0 0
        %814 = vmatpush1.bf16.msra.mxu0 0
        %815 = vmatprep.subr.bf16.mxu0 0
        %816 = vmatpush1.bf16.msra.mxu0 0
        %817 = vmatprep.subr.bf16.mxu0 0
        %818 = vmatpush1.bf16.msra.mxu0 0
        %819 = vmatprep.subr.bf16.mxu0 0
        %820 = vmatpush1.bf16.msra.mxu0 0
        %821 = vmatprep.mubr.bf16.mxu0 0
        %822 = vmatmul.mubr.bf16.gmra.mrb[0].mxu0 %v784
        %v823 = vpop.f32.mrb[0].mxu0
        %v824 = vadd.f32 %v291, %v823
        %v825 = vpop.f32.mrb[0].mxu0
        %v826 = vpop.f32.mrb[0].mxu0
        %v827 = vadd.f32 %v291, %v826
        %v828 = vpop.f32.mrb[0].mxu0
        %829 = vmatprep.mubr.bf16.mxu0 0
        %830 = vmatmul.mubr.bf16.gmra.mrb[0].mxu0 %v787
        %v831 = vpop.f32.mrb[0].mxu0
        %v832 = vadd.f32 %v291, %v831
        %v833 = vpop.f32.mrb[0].mxu0
        %v834 = vpop.f32.mrb[0].mxu0
        %v835 = vadd.f32 %v291, %v834
        %v836 = vpop.f32.mrb[0].mxu0
        %837 = vdwg.mxu0
        %v838 = vmax.f32 %v824, 0.0
        %v839 = vmax.f32 %v827, 0.0
        %v840 = vmax.f32 %v832, 0.0
        %v841 = vmax.f32 %v835, 0.0
        %v842 = vadd.f32 %v775, %v838
        %v843 = vadd.f32 %v776, %v839
        %v844 = vadd.f32 %v777, %v840
        %v845 = vadd.f32 %v778, %v841
        %v846 = vmul.f32 %v842, 0.25
        %v847 = vmul.f32 %v843, 0.25
        %v848 = vmul.f32 %v844, 0.25
        %v849 = vmul.f32 %v845, 0.25
        %v850 = vpack.c.bf16 %v847, %v846
        %v851 = vpack.c.bf16 %v849, %v848
        %s852 = scalar_lea.vmem [#allocation7], 16
        %v853 = vld [vmem:[%s852] sm:$0xf]
        %v854 = vld [vmem:[%s852 + $0x4] sm:$0xf]
        %v855 = vld [vmem:[%s852 + $0x8] sm:$0xf]
        %v856 = vld [vmem:[%s852 + $0xc] sm:$0xf]
        %v861 = vunpack.c.l.b16 %v853
        %v862 = vunpack.c.l.b16 %v854
        %v863 = vunpack.c.l.b16 %v855
        %v864 = vunpack.c.l.b16 %v856
        %v865 = vpack.c.b16 %v862, %v861
        %v866 = vpack.c.b16 %v864, %v863
        %v870 = vsel %vm305, %v850, 0
        %v873 = vsel %vm305, %v851, 0
        %875 = vmatprep.subr.bf16.mxu0 0
        %876 = vmatpush1.bf16.msra.mxu0 %v865
        %877 = vmatprep.subr.bf16.mxu0 0
        %878 = vmatpush1.bf16.msra.mxu0 %v866
        %879 = vmatprep.subr.bf16.mxu0 0
        %880 = vmatpush1.bf16.msra.mxu0 0
        %881 = vmatprep.subr.bf16.mxu0 0
        %882 = vmatpush1.bf16.msra.mxu0 0
        %883 = vmatprep.subr.bf16.mxu0 0
        %884 = vmatpush1.bf16.msra.mxu0 0
        %885 = vmatprep.subr.bf16.mxu0 0
        %886 = vmatpush1.bf16.msra.mxu0 0
        %887 = vmatprep.subr.bf16.mxu0 0
        %888 = vmatpush1.bf16.msra.mxu0 0
        %889 = vmatprep.subr.bf16.mxu0 0
        %890 = vmatpush1.bf16.msra.mxu0 0
        %891 = vmatprep.subr.bf16.mxu0 0
        %892 = vmatpush1.bf16.msra.mxu0 0
        %893 = vmatprep.subr.bf16.mxu0 0
        %894 = vmatpush1.bf16.msra.mxu0 0
        %895 = vmatprep.subr.bf16.mxu0 0
        %896 = vmatpush1.bf16.msra.mxu0 0
        %897 = vmatprep.subr.bf16.mxu0 0
        %898 = vmatpush1.bf16.msra.mxu0 0
        %899 = vmatprep.subr.bf16.mxu0 0
        %900 = vmatpush1.bf16.msra.mxu0 0
        %901 = vmatprep.subr.bf16.mxu0 0
        %902 = vmatpush1.bf16.msra.mxu0 0
        %903 = vmatprep.subr.bf16.mxu0 0
        %904 = vmatpush1.bf16.msra.mxu0 0
        %905 = vmatprep.subr.bf16.mxu0 0
        %906 = vmatpush1.bf16.msra.mxu0 0
        %907 = vmatprep.mubr.bf16.mxu0 0
        %908 = vmatmul.mubr.bf16.gmra.mrb[0].mxu0 %v870
        %v909 = vpop.f32.mrb[0].mxu0
        %v910 = vadd.f32 0.0, %v909
        %v911 = vpop.f32.mrb[0].mxu0
        %v912 = vpop.f32.mrb[0].mxu0
        %v913 = vadd.f32 0.0, %v912
        %v914 = vpop.f32.mrb[0].mxu0
        %915 = vmatprep.mubr.bf16.mxu0 0
        %916 = vmatmul.mubr.bf16.gmra.mrb[0].mxu0 %v873
        %v917 = vpop.f32.mrb[0].mxu0
        %v918 = vadd.f32 0.0, %v917
        %v919 = vpop.f32.mrb[0].mxu0
        %v920 = vpop.f32.mrb[0].mxu0
        %v921 = vadd.f32 0.0, %v920
        %v922 = vpop.f32.mrb[0].mxu0
        %923 = vdwg.mxu0
        %v928 = vunpack.c.l.b16 %v574
        %v929 = vunpack.c.l.b16 %v575
        %v930 = vunpack.c.l.b16 %v576
        %v931 = vunpack.c.l.b16 %v577
        %v932 = vpack.c.b16 %v929, %v928
        %v933 = vpack.c.b16 %v931, %v930
        %v937 = vsel %vm305, %v572, 0
        %v940 = vsel %vm305, %v573, 0
        %942 = vmatprep.subr.bf16.mxu0 0
        %943 = vmatpush1.bf16.msra.mxu0 %v932
        %944 = vmatprep.subr.bf16.mxu0 0
        %945 = vmatpush1.bf16.msra.mxu0 %v933
        %946 = vmatprep.subr.bf16.mxu0 0
        %947 = vmatpush1.bf16.msra.mxu0 0
        %948 = vmatprep.subr.bf16.mxu0 0
        %949 = vmatpush1.bf16.msra.mxu0 0
        %950 = vmatprep.subr.bf16.mxu0 0
        %951 = vmatpush1.bf16.msra.mxu0 0
        %952 = vmatprep.subr.bf16.mxu0 0
        %953 = vmatpush1.bf16.msra.mxu0 0
        %954 = vmatprep.subr.bf16.mxu0 0
        %955 = vmatpush1.bf16.msra.mxu0 0
        %956 = vmatprep.subr.bf16.mxu0 0
        %957 = vmatpush1.bf16.msra.mxu0 0
        %958 = vmatprep.subr.bf16.mxu0 0
        %959 = vmatpush1.bf16.msra.mxu0 0
        %960 = vmatprep.subr.bf16.mxu0 0
        %961 = vmatpush1.bf16.msra.mxu0 0
        %962 = vmatprep.subr.bf16.mxu0 0
        %963 = vmatpush1.bf16.msra.mxu0 0
        %964 = vmatprep.subr.bf16.mxu0 0
        %965 = vmatpush1.bf16.msra.mxu0 0
        %966 = vmatprep.subr.bf16.mxu0 0
        %967 = vmatpush1.bf16.msra.mxu0 0
        %968 = vmatprep.subr.bf16.mxu0 0
        %969 = vmatpush1.bf16.msra.mxu0 0
        %970 = vmatprep.subr.bf16.mxu0 0
        %971 = vmatpush1.bf16.msra.mxu0 0
        %972 = vmatprep.subr.bf16.mxu0 0
        %973 = vmatpush1.bf16.msra.mxu0 0
        %974 = vmatprep.mubr.bf16.mxu0 0
        %975 = vmatmul.mubr.bf16.gmra.mrb[0].mxu0 %v937
        %v976 = vpop.f32.mrb[0].mxu0
        %v977 = vadd.f32 %v910, %v976
        %v978 = vpop.f32.mrb[0].mxu0
        %v979 = vpop.f32.mrb[0].mxu0
        %v980 = vadd.f32 %v913, %v979
        %v981 = vpop.f32.mrb[0].mxu0
        %982 = vmatprep.mubr.bf16.mxu0 0
        %983 = vmatmul.mubr.bf16.gmra.mrb[0].mxu0 %v940
        %v984 = vpop.f32.mrb[0].mxu0
        %v985 = vadd.f32 %v918, %v984
        %v986 = vpop.f32.mrb[0].mxu0
        %v987 = vpop.f32.mrb[0].mxu0
        %v988 = vadd.f32 %v921, %v987
        %v989 = vpop.f32.mrb[0].mxu0
        %990 = vdwg.mxu0
        %v991 = vld [vmem:[%s238 + $0x10] sm:$0xff]
        %v992 = vld [vmem:[%s238 + $0x30] sm:$0xff]
        %v993 = vld [vmem:[%s238 + $0x50] sm:$0xff]
        %v994 = vld [vmem:[%s238 + $0x70] sm:$0xff]
        %v995 = vpack.c.bf16 %v992, %v991
        %v996 = vpack.c.bf16 %v994, %v993
        %v998 = vsel %vm305, %v995, 0
        %v1001 = vsel %vm305, %v996, 0
        %1003 = vmatprep.subr.bf16.mxu0 0
        %1004 = vmatpush1.bf16.msra.mxu0 %v301
        %1005 = vmatprep.subr.bf16.mxu0 0
        %1006 = vmatpush1.bf16.msra.mxu0 %v302
        %1007 = vmatprep.subr.bf16.mxu0 0
        %1008 = vmatpush1.bf16.msra.mxu0 0
        %1009 = vmatprep.subr.bf16.mxu0 0
        %1010 = vmatpush1.bf16.msra.mxu0 0
        %1011 = vmatprep.subr.bf16.mxu0 0
        %1012 = vmatpush1.bf16.msra.mxu0 0
        %1013 = vmatprep.subr.bf16.mxu0 0
        %1014 = vmatpush1.bf16.msra.mxu0 0
        %1015 = vmatprep.subr.bf16.mxu0 0
        %1016 = vmatpush1.bf16.msra.mxu0 0
        %1017 = vmatprep.subr.bf16.mxu0 0
        %1018 = vmatpush1.bf16.msra.mxu0 0
        %1019 = vmatprep.subr.bf16.mxu0 0
        %1020 = vmatpush1.bf16.msra.mxu0 0
        %1021 = vmatprep.subr.bf16.mxu0 0
        %1022 = vmatpush1.bf16.msra.mxu0 0
        %1023 = vmatprep.subr.bf16.mxu0 0
        %1024 = vmatpush1.bf16.msra.mxu0 0
        %1025 = vmatprep.subr.bf16.mxu0 0
        %1026 = vmatpush1.bf16.msra.mxu0 0
        %1027 = vmatprep.subr.bf16.mxu0 0
        %1028 = vmatpush1.bf16.msra.mxu0 0
        %1029 = vmatprep.subr.bf16.mxu0 0
        %1030 = vmatpush1.bf16.msra.mxu0 0
        %1031 = vmatprep.subr.bf16.mxu0 0
        %1032 = vmatpush1.bf16.msra.mxu0 0
        %1033 = vmatprep.subr.bf16.mxu0 0
        %1034 = vmatpush1.bf16.msra.mxu0 0
        %1035 = vmatprep.mubr.bf16.mxu0 0
        %1036 = vmatmul.mubr.bf16.gmra.mrb[0].mxu0 %v998
        %v1037 = vpop.f32.mrb[0].mxu0
        %v1038 = vadd.f32 %v291, %v1037
        %v1039 = vpop.f32.mrb[0].mxu0
        %v1040 = vpop.f32.mrb[0].mxu0
        %v1041 = vadd.f32 %v291, %v1040
        %v1042 = vpop.f32.mrb[0].mxu0
        %1043 = vmatprep.mubr.bf16.mxu0 0
        %1044 = vmatmul.mubr.bf16.gmra.mrb[0].mxu0 %v1001
        %v1045 = vpop.f32.mrb[0].mxu0
        %v1046 = vadd.f32 %v291, %v1045
        %v1047 = vpop.f32.mrb[0].mxu0
        %v1048 = vpop.f32.mrb[0].mxu0
        %v1049 = vadd.f32 %v291, %v1048
        %v1050 = vpop.f32.mrb[0].mxu0
        %1051 = vdwg.mxu0
        %v1052 = vmax.f32 %v1038, 0.0
        %v1053 = vmax.f32 %v1041, 0.0
        %v1054 = vmax.f32 %v1046, 0.0
        %v1055 = vmax.f32 %v1049, 0.0
        %1058 = vrot.lane.b32.xlu0 %v995, 96
        %v1059 = vpop.permute.xlu0 %1058
        %1060 = vrot.lane.b32.xlu0 %v996, 96
        %v1061 = vpop.permute.xlu0 %1060
        %v1063 = vsel %vm305, %v1059, 0
        %v1066 = vsel %vm305, %v1061, 0
        %1068 = vmatprep.subr.bf16.mxu0 0
        %1069 = vmatpush1.bf16.msra.mxu0 %v301
        %1070 = vmatprep.subr.bf16.mxu0 0
        %1071 = vmatpush1.bf16.msra.mxu0 %v302
        %1072 = vmatprep.subr.bf16.mxu0 0
        %1073 = vmatpush1.bf16.msra.mxu0 0
        %1074 = vmatprep.subr.bf16.mxu0 0
        %1075 = vmatpush1.bf16.msra.mxu0 0
        %1076 = vmatprep.subr.bf16.mxu0 0
        %1077 = vmatpush1.bf16.msra.mxu0 0
        %1078 = vmatprep.subr.bf16.mxu0 0
        %1079 = vmatpush1.bf16.msra.mxu0 0
        %1080 = vmatprep.subr.bf16.mxu0 0
        %1081 = vmatpush1.bf16.msra.mxu0 0
        %1082 = vmatprep.subr.bf16.mxu0 0
        %1083 = vmatpush1.bf16.msra.mxu0 0
        %1084 = vmatprep.subr.bf16.mxu0 0
        %1085 = vmatpush1.bf16.msra.mxu0 0
        %1086 = vmatprep.subr.bf16.mxu0 0
        %1087 = vmatpush1.bf16.msra.mxu0 0
        %1088 = vmatprep.subr.bf16.mxu0 0
        %1089 = vmatpush1.bf16.msra.mxu0 0
        %1090 = vmatprep.subr.bf16.mxu0 0
        %1091 = vmatpush1.bf16.msra.mxu0 0
        %1092 = vmatprep.subr.bf16.mxu0 0
        %1093 = vmatpush1.bf16.msra.mxu0 0
        %1094 = vmatprep.subr.bf16.mxu0 0
        %1095 = vmatpush1.bf16.msra.mxu0 0
        %1096 = vmatprep.subr.bf16.mxu0 0
        %1097 = vmatpush1.bf16.msra.mxu0 0
        %1098 = vmatprep.subr.bf16.mxu0 0
        %1099 = vmatpush1.bf16.msra.mxu0 0
        %1100 = vmatprep.mubr.bf16.mxu0 0
        %1101 = vmatmul.mubr.bf16.gmra.mrb[0].mxu0 %v1063
        %v1102 = vpop.f32.mrb[0].mxu0
        %v1103 = vadd.f32 %v291, %v1102
        %v1104 = vpop.f32.mrb[0].mxu0
        %v1105 = vpop.f32.mrb[0].mxu0
        %v1106 = vadd.f32 %v291, %v1105
        %v1107 = vpop.f32.mrb[0].mxu0
        %1108 = vmatprep.mubr.bf16.mxu0 0
        %1109 = vmatmul.mubr.bf16.gmra.mrb[0].mxu0 %v1066
        %v1110 = vpop.f32.mrb[0].mxu0
        %v1111 = vadd.f32 %v291, %v1110
        %v1112 = vpop.f32.mrb[0].mxu0
        %v1113 = vpop.f32.mrb[0].mxu0
        %v1114 = vadd.f32 %v291, %v1113
        %v1115 = vpop.f32.mrb[0].mxu0
        %1116 = vdwg.mxu0
        %v1117 = vmax.f32 %v1103, 0.0
        %v1118 = vmax.f32 %v1106, 0.0
        %v1119 = vmax.f32 %v1111, 0.0
        %v1120 = vmax.f32 %v1114, 0.0
        %v1121 = vadd.f32 %v1052, %v1117
        %v1122 = vadd.f32 %v1053, %v1118
        %v1123 = vadd.f32 %v1054, %v1119
        %v1124 = vadd.f32 %v1055, %v1120
        %1125 = vrot.lane.b32.xlu0 %v995, 64
        %v1126 = vpop.permute.xlu0 %1125
        %1127 = vrot.lane.b32.xlu0 %v996, 64
        %v1128 = vpop.permute.xlu0 %1127
        %v1130 = vsel %vm305, %v1126, 0
        %v1133 = vsel %vm305, %v1128, 0
        %1135 = vmatprep.subr.bf16.mxu0 0
        %1136 = vmatpush1.bf16.msra.mxu0 %v301
        %1137 = vmatprep.subr.bf16.mxu0 0
        %1138 = vmatpush1.bf16.msra.mxu0 %v302
        %1139 = vmatprep.subr.bf16.mxu0 0
        %1140 = vmatpush1.bf16.msra.mxu0 0
        %1141 = vmatprep.subr.bf16.mxu0 0
        %1142 = vmatpush1.bf16.msra.mxu0 0
        %1143 = vmatprep.subr.bf16.mxu0 0
        %1144 = vmatpush1.bf16.msra.mxu0 0
        %1145 = vmatprep.subr.bf16.mxu0 0
        %1146 = vmatpush1.bf16.msra.mxu0 0
        %1147 = vmatprep.subr.bf16.mxu0 0
        %1148 = vmatpush1.bf16.msra.mxu0 0
        %1149 = vmatprep.subr.bf16.mxu0 0
        %1150 = vmatpush1.bf16.msra.mxu0 0
        %1151 = vmatprep.subr.bf16.mxu0 0
        %1152 = vmatpush1.bf16.msra.mxu0 0
        %1153 = vmatprep.subr.bf16.mxu0 0
        %1154 = vmatpush1.bf16.msra.mxu0 0
        %1155 = vmatprep.subr.bf16.mxu0 0
        %1156 = vmatpush1.bf16.msra.mxu0 0
        %1157 = vmatprep.subr.bf16.mxu0 0
        %1158 = vmatpush1.bf16.msra.mxu0 0
        %1159 = vmatprep.subr.bf16.mxu0 0
        %1160 = vmatpush1.bf16.msra.mxu0 0
        %1161 = vmatprep.subr.bf16.mxu0 0
        %1162 = vmatpush1.bf16.msra.mxu0 0
        %1163 = vmatprep.subr.bf16.mxu0 0
        %1164 = vmatpush1.bf16.msra.mxu0 0
        %1165 = vmatprep.subr.bf16.mxu0 0
        %1166 = vmatpush1.bf16.msra.mxu0 0
        %1167 = vmatprep.mubr.bf16.mxu0 0
        %1168 = vmatmul.mubr.bf16.gmra.mrb[0].mxu0 %v1130
        %v1169 = vpop.f32.mrb[0].mxu0
        %v1170 = vadd.f32 %v291, %v1169
        %v1171 = vpop.f32.mrb[0].mxu0
        %v1172 = vpop.f32.mrb[0].mxu0
        %v1173 = vadd.f32 %v291, %v1172
        %v1174 = vpop.f32.mrb[0].mxu0
        %1175 = vmatprep.mubr.bf16.mxu0 0
        %1176 = vmatmul.mubr.bf16.gmra.mrb[0].mxu0 %v1133
        %v1177 = vpop.f32.mrb[0].mxu0
        %v1178 = vadd.f32 %v291, %v1177
        %v1179 = vpop.f32.mrb[0].mxu0
        %v1180 = vpop.f32.mrb[0].mxu0
        %v1181 = vadd.f32 %v291, %v1180
        %v1182 = vpop.f32.mrb[0].mxu0
        %1183 = vdwg.mxu0
        %v1184 = vmax.f32 %v1170, 0.0
        %v1185 = vmax.f32 %v1173, 0.0
        %v1186 = vmax.f32 %v1178, 0.0
        %v1187 = vmax.f32 %v1181, 0.0
        %v1188 = vadd.f32 %v1121, %v1184
        %v1189 = vadd.f32 %v1122, %v1185
        %v1190 = vadd.f32 %v1123, %v1186
        %v1191 = vadd.f32 %v1124, %v1187
        %1192 = vrot.lane.b32.xlu0 %v995, 32
        %v1193 = vpop.permute.xlu0 %1192
        %1194 = vrot.lane.b32.xlu0 %v996, 32
        %v1195 = vpop.permute.xlu0 %1194
        %v1197 = vsel %vm305, %v1193, 0
        %v1200 = vsel %vm305, %v1195, 0
        %1202 = vmatprep.subr.bf16.mxu0 0
        %1203 = vmatpush1.bf16.msra.mxu0 %v301
        %1204 = vmatprep.subr.bf16.mxu0 0
        %1205 = vmatpush1.bf16.msra.mxu0 %v302
        %1206 = vmatprep.subr.bf16.mxu0 0
        %1207 = vmatpush1.bf16.msra.mxu0 0
        %1208 = vmatprep.subr.bf16.mxu0 0
        %1209 = vmatpush1.bf16.msra.mxu0 0
        %1210 = vmatprep.subr.bf16.mxu0 0
        %1211 = vmatpush1.bf16.msra.mxu0 0
        %1212 = vmatprep.subr.bf16.mxu0 0
        %1213 = vmatpush1.bf16.msra.mxu0 0
        %1214 = vmatprep.subr.bf16.mxu0 0
        %1215 = vmatpush1.bf16.msra.mxu0 0
        %1216 = vmatprep.subr.bf16.mxu0 0
        %1217 = vmatpush1.bf16.msra.mxu0 0
        %1218 = vmatprep.subr.bf16.mxu0 0
        %1219 = vmatpush1.bf16.msra.mxu0 0
        %1220 = vmatprep.subr.bf16.mxu0 0
        %1221 = vmatpush1.bf16.msra.mxu0 0
        %1222 = vmatprep.subr.bf16.mxu0 0
        %1223 = vmatpush1.bf16.msra.mxu0 0
        %1224 = vmatprep.subr.bf16.mxu0 0
        %1225 = vmatpush1.bf16.msra.mxu0 0
        %1226 = vmatprep.subr.bf16.mxu0 0
        %1227 = vmatpush1.bf16.msra.mxu0 0
        %1228 = vmatprep.subr.bf16.mxu0 0
        %1229 = vmatpush1.bf16.msra.mxu0 0
        %1230 = vmatprep.subr.bf16.mxu0 0
        %1231 = vmatpush1.bf16.msra.mxu0 0
        %1232 = vmatprep.subr.bf16.mxu0 0
        %1233 = vmatpush1.bf16.msra.mxu0 0
        %1234 = vmatprep.mubr.bf16.mxu0 0
        %1235 = vmatmul.mubr.bf16.gmra.mrb[0].mxu0 %v1197
        %v1236 = vpop.f32.mrb[0].mxu0
        %v1237 = vadd.f32 %v291, %v1236
        %v1238 = vpop.f32.mrb[0].mxu0
        %v1239 = vpop.f32.mrb[0].mxu0
        %v1240 = vadd.f32 %v291, %v1239
        %v1241 = vpop.f32.mrb[0].mxu0
        %1242 = vmatprep.mubr.bf16.mxu0 0
        %1243 = vmatmul.mubr.bf16.gmra.mrb[0].mxu0 %v1200
        %v1244 = vpop.f32.mrb[0].mxu0
        %v1245 = vadd.f32 %v291, %v1244
        %v1246 = vpop.f32.mrb[0].mxu0
        %v1247 = vpop.f32.mrb[0].mxu0
        %v1248 = vadd.f32 %v291, %v1247
        %v1249 = vpop.f32.mrb[0].mxu0
        %1250 = vdwg.mxu0
        %v1251 = vmax.f32 %v1237, 0.0
        %v1252 = vmax.f32 %v1240, 0.0
        %v1253 = vmax.f32 %v1245, 0.0
        %v1254 = vmax.f32 %v1248, 0.0
        %v1255 = vadd.f32 %v1188, %v1251
        %v1256 = vadd.f32 %v1189, %v1252
        %v1257 = vadd.f32 %v1190, %v1253
        %v1258 = vadd.f32 %v1191, %v1254
        %v1259 = vmul.f32 %v1255, 0.25
        %v1260 = vmul.f32 %v1256, 0.25
        %v1261 = vmul.f32 %v1257, 0.25
        %v1262 = vmul.f32 %v1258, 0.25
        %v1263 = vpack.c.bf16 %v1260, %v1259
        %v1264 = vpack.c.bf16 %v1262, %v1261
        %s1265 = scalar_lea.vmem [#allocation7], 32
        %v1266 = vld [vmem:[%s1265] sm:$0xf]
        %v1267 = vld [vmem:[%s1265 + $0x4] sm:$0xf]
        %v1268 = vld [vmem:[%s1265 + $0x8] sm:$0xf]
        %v1269 = vld [vmem:[%s1265 + $0xc] sm:$0xf]
        %v1274 = vunpack.c.l.b16 %v1266
        %v1275 = vunpack.c.l.b16 %v1267
        %v1276 = vunpack.c.l.b16 %v1268
        %v1277 = vunpack.c.l.b16 %v1269
        %v1278 = vpack.c.b16 %v1275, %v1274
        %v1279 = vpack.c.b16 %v1277, %v1276
        %v1283 = vsel %vm305, %v1263, 0
        %v1286 = vsel %vm305, %v1264, 0
        %1288 = vmatprep.subr.bf16.mxu0 0
        %1289 = vmatpush1.bf16.msra.mxu0 %v1278
        %1290 = vmatprep.subr.bf16.mxu0 0
        %1291 = vmatpush1.bf16.msra.mxu0 %v1279
        %1292 = vmatprep.subr.bf16.mxu0 0
        %1293 = vmatpush1.bf16.msra.mxu0 0
        %1294 = vmatprep.subr.bf16.mxu0 0
        %1295 = vmatpush1.bf16.msra.mxu0 0
        %1296 = vmatprep.subr.bf16.mxu0 0
        %1297 = vmatpush1.bf16.msra.mxu0 0
        %1298 = vmatprep.subr.bf16.mxu0 0
        %1299 = vmatpush1.bf16.msra.mxu0 0
        %1300 = vmatprep.subr.bf16.mxu0 0
        %1301 = vmatpush1.bf16.msra.mxu0 0
        %1302 = vmatprep.subr.bf16.mxu0 0
        %1303 = vmatpush1.bf16.msra.mxu0 0
        %1304 = vmatprep.subr.bf16.mxu0 0
        %1305 = vmatpush1.bf16.msra.mxu0 0
        %1306 = vmatprep.subr.bf16.mxu0 0
        %1307 = vmatpush1.bf16.msra.mxu0 0
        %1308 = vmatprep.subr.bf16.mxu0 0
        %1309 = vmatpush1.bf16.msra.mxu0 0
        %1310 = vmatprep.subr.bf16.mxu0 0
        %1311 = vmatpush1.bf16.msra.mxu0 0
        %1312 = vmatprep.subr.bf16.mxu0 0
        %1313 = vmatpush1.bf16.msra.mxu0 0
        %1314 = vmatprep.subr.bf16.mxu0 0
        %1315 = vmatpush1.bf16.msra.mxu0 0
        %1316 = vmatprep.subr.bf16.mxu0 0
        %1317 = vmatpush1.bf16.msra.mxu0 0
        %1318 = vmatprep.subr.bf16.mxu0 0
        %1319 = vmatpush1.bf16.msra.mxu0 0
        %1320 = vmatprep.mubr.bf16.mxu0 0
        %1321 = vmatmul.mubr.bf16.gmra.mrb[0].mxu0 %v1283
        %v1322 = vpop.f32.mrb[0].mxu0
        %v1323 = vadd.f32 0.0, %v1322
        %v1324 = vpop.f32.mrb[0].mxu0
        %v1325 = vpop.f32.mrb[0].mxu0
        %v1326 = vadd.f32 0.0, %v1325
        %v1327 = vpop.f32.mrb[0].mxu0
        %1328 = vmatprep.mubr.bf16.mxu0 0
        %1329 = vmatmul.mubr.bf16.gmra.mrb[0].mxu0 %v1286
        %v1330 = vpop.f32.mrb[0].mxu0
        %v1331 = vadd.f32 0.0, %v1330
        %v1332 = vpop.f32.mrb[0].mxu0
        %v1333 = vpop.f32.mrb[0].mxu0
        %v1334 = vadd.f32 0.0, %v1333
        %v1335 = vpop.f32.mrb[0].mxu0
        %1336 = vdwg.mxu0
        %v1337 = vadd.f32 %v977, %v1323
        %v1338 = vadd.f32 %v980, %v1326
        %v1339 = vadd.f32 %v985, %v1331
        %v1340 = vadd.f32 %v988, %v1334
        %v1341 = vld [vmem:[%s238 + $0x18] sm:$0xff]
        %v1342 = vld [vmem:[%s238 + $0x38] sm:$0xff]
        %v1343 = vld [vmem:[%s238 + $0x58] sm:$0xff]
        %v1344 = vld [vmem:[%s238 + $0x78] sm:$0xff]
        %v1345 = vpack.c.bf16 %v1342, %v1341
        %v1346 = vpack.c.bf16 %v1344, %v1343
        %v1348 = vsel %vm305, %v1345, 0
        %v1351 = vsel %vm305, %v1346, 0
        %1353 = vmatprep.subr.bf16.mxu0 0
        %1354 = vmatpush1.bf16.msra.mxu0 %v301
        %1355 = vmatprep.subr.bf16.mxu0 0
        %1356 = vmatpush1.bf16.msra.mxu0 %v302
        %1357 = vmatprep.subr.bf16.mxu0 0
        %1358 = vmatpush1.bf16.msra.mxu0 0
        %1359 = vmatprep.subr.bf16.mxu0 0
        %1360 = vmatpush1.bf16.msra.mxu0 0
        %1361 = vmatprep.subr.bf16.mxu0 0
        %1362 = vmatpush1.bf16.msra.mxu0 0
        %1363 = vmatprep.subr.bf16.mxu0 0
        %1364 = vmatpush1.bf16.msra.mxu0 0
        %1365 = vmatprep.subr.bf16.mxu0 0
        %1366 = vmatpush1.bf16.msra.mxu0 0
        %1367 = vmatprep.subr.bf16.mxu0 0
        %1368 = vmatpush1.bf16.msra.mxu0 0
        %1369 = vmatprep.subr.bf16.mxu0 0
        %1370 = vmatpush1.bf16.msra.mxu0 0
        %1371 = vmatprep.subr.bf16.mxu0 0
        %1372 = vmatpush1.bf16.msra.mxu0 0
        %1373 = vmatprep.subr.bf16.mxu0 0
        %1374 = vmatpush1.bf16.msra.mxu0 0
        %1375 = vmatprep.subr.bf16.mxu0 0
        %1376 = vmatpush1.bf16.msra.mxu0 0
        %1377 = vmatprep.subr.bf16.mxu0 0
        %1378 = vmatpush1.bf16.msra.mxu0 0
        %1379 = vmatprep.subr.bf16.mxu0 0
        %1380 = vmatpush1.bf16.msra.mxu0 0
        %1381 = vmatprep.subr.bf16.mxu0 0
        %1382 = vmatpush1.bf16.msra.mxu0 0
        %1383 = vmatprep.subr.bf16.mxu0 0
        %1384 = vmatpush1.bf16.msra.mxu0 0
        %1385 = vmatprep.mubr.bf16.mxu0 0
        %1386 = vmatmul.mubr.bf16.gmra.mrb[0].mxu0 %v1348
        %v1387 = vpop.f32.mrb[0].mxu0
        %v1388 = vadd.f32 %v291, %v1387
        %v1389 = vpop.f32.mrb[0].mxu0
        %v1390 = vpop.f32.mrb[0].mxu0
        %v1391 = vadd.f32 %v291, %v1390
        %v1392 = vpop.f32.mrb[0].mxu0
        %1393 = vmatprep.mubr.bf16.mxu0 0
        %1394 = vmatmul.mubr.bf16.gmra.mrb[0].mxu0 %v1351
        %v1395 = vpop.f32.mrb[0].mxu0
        %v1396 = vadd.f32 %v291, %v1395
        %v1397 = vpop.f32.mrb[0].mxu0
        %v1398 = vpop.f32.mrb[0].mxu0
        %v1399 = vadd.f32 %v291, %v1398
        %v1400 = vpop.f32.mrb[0].mxu0
        %1401 = vdwg.mxu0
        %v1402 = vmax.f32 %v1388, 0.0
        %v1403 = vmax.f32 %v1391, 0.0
        %v1404 = vmax.f32 %v1396, 0.0
        %v1405 = vmax.f32 %v1399, 0.0
        %1408 = vrot.lane.b32.xlu0 %v1345, 96
        %v1409 = vpop.permute.xlu0 %1408
        %1410 = vrot.lane.b32.xlu0 %v1346, 96
        %v1411 = vpop.permute.xlu0 %1410
        %v1413 = vsel %vm305, %v1409, 0
        %v1416 = vsel %vm305, %v1411, 0
        %1418 = vmatprep.subr.bf16.mxu0 0
        %1419 = vmatpush1.bf16.msra.mxu0 %v301
        %1420 = vmatprep.subr.bf16.mxu0 0
        %1421 = vmatpush1.bf16.msra.mxu0 %v302
        %1422 = vmatprep.subr.bf16.mxu0 0
        %1423 = vmatpush1.bf16.msra.mxu0 0
        %1424 = vmatprep.subr.bf16.mxu0 0
        %1425 = vmatpush1.bf16.msra.mxu0 0
        %1426 = vmatprep.subr.bf16.mxu0 0
        %1427 = vmatpush1.bf16.msra.mxu0 0
        %1428 = vmatprep.subr.bf16.mxu0 0
        %1429 = vmatpush1.bf16.msra.mxu0 0
        %1430 = vmatprep.subr.bf16.mxu0 0
        %1431 = vmatpush1.bf16.msra.mxu0 0
        %1432 = vmatprep.subr.bf16.mxu0 0
        %1433 = vmatpush1.bf16.msra.mxu0 0
        %1434 = vmatprep.subr.bf16.mxu0 0
        %1435 = vmatpush1.bf16.msra.mxu0 0
        %1436 = vmatprep.subr.bf16.mxu0 0
        %1437 = vmatpush1.bf16.msra.mxu0 0
        %1438 = vmatprep.subr.bf16.mxu0 0
        %1439 = vmatpush1.bf16.msra.mxu0 0
        %1440 = vmatprep.subr.bf16.mxu0 0
        %1441 = vmatpush1.bf16.msra.mxu0 0
        %1442 = vmatprep.subr.bf16.mxu0 0
        %1443 = vmatpush1.bf16.msra.mxu0 0
        %1444 = vmatprep.subr.bf16.mxu0 0
        %1445 = vmatpush1.bf16.msra.mxu0 0
        %1446 = vmatprep.subr.bf16.mxu0 0
        %1447 = vmatpush1.bf16.msra.mxu0 0
        %1448 = vmatprep.subr.bf16.mxu0 0
        %1449 = vmatpush1.bf16.msra.mxu0 0
        %1450 = vmatprep.mubr.bf16.mxu0 0
        %1451 = vmatmul.mubr.bf16.gmra.mrb[0].mxu0 %v1413
        %v1452 = vpop.f32.mrb[0].mxu0
        %v1453 = vadd.f32 %v291, %v1452
        %v1454 = vpop.f32.mrb[0].mxu0
        %v1455 = vpop.f32.mrb[0].mxu0
        %v1456 = vadd.f32 %v291, %v1455
        %v1457 = vpop.f32.mrb[0].mxu0
        %1458 = vmatprep.mubr.bf16.mxu0 0
        %1459 = vmatmul.mubr.bf16.gmra.mrb[0].mxu0 %v1416
        %v1460 = vpop.f32.mrb[0].mxu0
        %v1461 = vadd.f32 %v291, %v1460
        %v1462 = vpop.f32.mrb[0].mxu0
        %v1463 = vpop.f32.mrb[0].mxu0
        %v1464 = vadd.f32 %v291, %v1463
        %v1465 = vpop.f32.mrb[0].mxu0
        %1466 = vdwg.mxu0
        %v1467 = vmax.f32 %v1453, 0.0
        %v1468 = vmax.f32 %v1456, 0.0
        %v1469 = vmax.f32 %v1461, 0.0
        %v1470 = vmax.f32 %v1464, 0.0
        %v1471 = vadd.f32 %v1402, %v1467
        %v1472 = vadd.f32 %v1403, %v1468
        %v1473 = vadd.f32 %v1404, %v1469
        %v1474 = vadd.f32 %v1405, %v1470
        %1475 = vrot.lane.b32.xlu0 %v1345, 64
        %v1476 = vpop.permute.xlu0 %1475
        %1477 = vrot.lane.b32.xlu0 %v1346, 64
        %v1478 = vpop.permute.xlu0 %1477
        %v1480 = vsel %vm305, %v1476, 0
        %v1483 = vsel %vm305, %v1478, 0
        %1485 = vmatprep.subr.bf16.mxu0 0
        %1486 = vmatpush1.bf16.msra.mxu0 %v301
        %1487 = vmatprep.subr.bf16.mxu0 0
        %1488 = vmatpush1.bf16.msra.mxu0 %v302
        %1489 = vmatprep.subr.bf16.mxu0 0
        %1490 = vmatpush1.bf16.msra.mxu0 0
        %1491 = vmatprep.subr.bf16.mxu0 0
        %1492 = vmatpush1.bf16.msra.mxu0 0
        %1493 = vmatprep.subr.bf16.mxu0 0
        %1494 = vmatpush1.bf16.msra.mxu0 0
        %1495 = vmatprep.subr.bf16.mxu0 0
        %1496 = vmatpush1.bf16.msra.mxu0 0
        %1497 = vmatprep.subr.bf16.mxu0 0
        %1498 = vmatpush1.bf16.msra.mxu0 0
        %1499 = vmatprep.subr.bf16.mxu0 0
        %1500 = vmatpush1.bf16.msra.mxu0 0
        %1501 = vmatprep.subr.bf16.mxu0 0
        %1502 = vmatpush1.bf16.msra.mxu0 0
        %1503 = vmatprep.subr.bf16.mxu0 0
        %1504 = vmatpush1.bf16.msra.mxu0 0
        %1505 = vmatprep.subr.bf16.mxu0 0
        %1506 = vmatpush1.bf16.msra.mxu0 0
        %1507 = vmatprep.subr.bf16.mxu0 0
        %1508 = vmatpush1.bf16.msra.mxu0 0
        %1509 = vmatprep.subr.bf16.mxu0 0
        %1510 = vmatpush1.bf16.msra.mxu0 0
        %1511 = vmatprep.subr.bf16.mxu0 0
        %1512 = vmatpush1.bf16.msra.mxu0 0
        %1513 = vmatprep.subr.bf16.mxu0 0
        %1514 = vmatpush1.bf16.msra.mxu0 0
        %1515 = vmatprep.subr.bf16.mxu0 0
        %1516 = vmatpush1.bf16.msra.mxu0 0
        %1517 = vmatprep.mubr.bf16.mxu0 0
        %1518 = vmatmul.mubr.bf16.gmra.mrb[0].mxu0 %v1480
        %v1519 = vpop.f32.mrb[0].mxu0
        %v1520 = vadd.f32 %v291, %v1519
        %v1521 = vpop.f32.mrb[0].mxu0
        %v1522 = vpop.f32.mrb[0].mxu0
        %v1523 = vadd.f32 %v291, %v1522
        %v1524 = vpop.f32.mrb[0].mxu0
        %1525 = vmatprep.mubr.bf16.mxu0 0
        %1526 = vmatmul.mubr.bf16.gmra.mrb[0].mxu0 %v1483
        %v1527 = vpop.f32.mrb[0].mxu0
        %v1528 = vadd.f32 %v291, %v1527
        %v1529 = vpop.f32.mrb[0].mxu0
        %v1530 = vpop.f32.mrb[0].mxu0
        %v1531 = vadd.f32 %v291, %v1530
        %v1532 = vpop.f32.mrb[0].mxu0
        %1533 = vdwg.mxu0
        %v1534 = vmax.f32 %v1520, 0.0
        %v1535 = vmax.f32 %v1523, 0.0
        %v1536 = vmax.f32 %v1528, 0.0
        %v1537 = vmax.f32 %v1531, 0.0
        %v1538 = vadd.f32 %v1471, %v1534
        %v1539 = vadd.f32 %v1472, %v1535
        %v1540 = vadd.f32 %v1473, %v1536
        %v1541 = vadd.f32 %v1474, %v1537
        %1542 = vrot.lane.b32.xlu0 %v1345, 32
        %v1543 = vpop.permute.xlu0 %1542
        %1544 = vrot.lane.b32.xlu0 %v1346, 32
        %v1545 = vpop.permute.xlu0 %1544
        %v1547 = vsel %vm305, %v1543, 0
        %v1550 = vsel %vm305, %v1545, 0
        %1552 = vmatprep.subr.bf16.mxu0 0
        %1553 = vmatpush1.bf16.msra.mxu0 %v301
        %1554 = vmatprep.subr.bf16.mxu0 0
        %1555 = vmatpush1.bf16.msra.mxu0 %v302
        %1556 = vmatprep.subr.bf16.mxu0 0
        %1557 = vmatpush1.bf16.msra.mxu0 0
        %1558 = vmatprep.subr.bf16.mxu0 0
        %1559 = vmatpush1.bf16.msra.mxu0 0
        %1560 = vmatprep.subr.bf16.mxu0 0
        %1561 = vmatpush1.bf16.msra.mxu0 0
        %1562 = vmatprep.subr.bf16.mxu0 0
        %1563 = vmatpush1.bf16.msra.mxu0 0
        %1564 = vmatprep.subr.bf16.mxu0 0
        %1565 = vmatpush1.bf16.msra.mxu0 0
        %1566 = vmatprep.subr.bf16.mxu0 0
        %1567 = vmatpush1.bf16.msra.mxu0 0
        %1568 = vmatprep.subr.bf16.mxu0 0
        %1569 = vmatpush1.bf16.msra.mxu0 0
        %1570 = vmatprep.subr.bf16.mxu0 0
        %1571 = vmatpush1.bf16.msra.mxu0 0
        %1572 = vmatprep.subr.bf16.mxu0 0
        %1573 = vmatpush1.bf16.msra.mxu0 0
        %1574 = vmatprep.subr.bf16.mxu0 0
        %1575 = vmatpush1.bf16.msra.mxu0 0
        %1576 = vmatprep.subr.bf16.mxu0 0
        %1577 = vmatpush1.bf16.msra.mxu0 0
        %1578 = vmatprep.subr.bf16.mxu0 0
        %1579 = vmatpush1.bf16.msra.mxu0 0
        %1580 = vmatprep.subr.bf16.mxu0 0
        %1581 = vmatpush1.bf16.msra.mxu0 0
        %1582 = vmatprep.subr.bf16.mxu0 0
        %1583 = vmatpush1.bf16.msra.mxu0 0
        %1584 = vmatprep.mubr.bf16.mxu0 0
        %1585 = vmatmul.mubr.bf16.gmra.mrb[0].mxu0 %v1547
        %v1586 = vpop.f32.mrb[0].mxu0
        %v1587 = vadd.f32 %v291, %v1586
        %v1588 = vpop.f32.mrb[0].mxu0
        %v1589 = vpop.f32.mrb[0].mxu0
        %v1590 = vadd.f32 %v291, %v1589
        %v1591 = vpop.f32.mrb[0].mxu0
        %1592 = vmatprep.mubr.bf16.mxu0 0
        %1593 = vmatmul.mubr.bf16.gmra.mrb[0].mxu0 %v1550
        %v1594 = vpop.f32.mrb[0].mxu0
        %v1595 = vadd.f32 %v291, %v1594
        %v1596 = vpop.f32.mrb[0].mxu0
        %v1597 = vpop.f32.mrb[0].mxu0
        %v1598 = vadd.f32 %v291, %v1597
        %v1599 = vpop.f32.mrb[0].mxu0
        %1600 = vdwg.mxu0
        %v1601 = vmax.f32 %v1587, 0.0
        %v1602 = vmax.f32 %v1590, 0.0
        %v1603 = vmax.f32 %v1595, 0.0
        %v1604 = vmax.f32 %v1598, 0.0
        %v1605 = vadd.f32 %v1538, %v1601
        %v1606 = vadd.f32 %v1539, %v1602
        %v1607 = vadd.f32 %v1540, %v1603
        %v1608 = vadd.f32 %v1541, %v1604
        %v1609 = vmul.f32 %v1605, 0.25
        %v1610 = vmul.f32 %v1606, 0.25
        %v1611 = vmul.f32 %v1607, 0.25
        %v1612 = vmul.f32 %v1608, 0.25
        %v1613 = vpack.c.bf16 %v1610, %v1609
        %v1614 = vpack.c.bf16 %v1612, %v1611
        %s1615 = scalar_lea.vmem [#allocation7], 48
        %v1616 = vld [vmem:[%s1615] sm:$0xf]
        %v1617 = vld [vmem:[%s1615 + $0x4] sm:$0xf]
        %v1618 = vld [vmem:[%s1615 + $0x8] sm:$0xf]
        %v1619 = vld [vmem:[%s1615 + $0xc] sm:$0xf]
        %v1624 = vunpack.c.l.b16 %v1616
        %v1625 = vunpack.c.l.b16 %v1617
        %v1626 = vunpack.c.l.b16 %v1618
        %v1627 = vunpack.c.l.b16 %v1619
        %v1628 = vpack.c.b16 %v1625, %v1624
        %v1629 = vpack.c.b16 %v1627, %v1626
        %v1633 = vsel %vm305, %v1613, 0
        %v1636 = vsel %vm305, %v1614, 0
        %1638 = vmatprep.subr.bf16.mxu0 0
        %1639 = vmatpush1.bf16.msra.mxu0 %v1628
        %1640 = vmatprep.subr.bf16.mxu0 0
        %1641 = vmatpush1.bf16.msra.mxu0 %v1629
        %1642 = vmatprep.subr.bf16.mxu0 0
        %1643 = vmatpush1.bf16.msra.mxu0 0
        %1644 = vmatprep.subr.bf16.mxu0 0
        %1645 = vmatpush1.bf16.msra.mxu0 0
        %1646 = vmatprep.subr.bf16.mxu0 0
        %1647 = vmatpush1.bf16.msra.mxu0 0
        %1648 = vmatprep.subr.bf16.mxu0 0
        %1649 = vmatpush1.bf16.msra.mxu0 0
        %1650 = vmatprep.subr.bf16.mxu0 0
        %1651 = vmatpush1.bf16.msra.mxu0 0
        %1652 = vmatprep.subr.bf16.mxu0 0
        %1653 = vmatpush1.bf16.msra.mxu0 0
        %1654 = vmatprep.subr.bf16.mxu0 0
        %1655 = vmatpush1.bf16.msra.mxu0 0
        %1656 = vmatprep.subr.bf16.mxu0 0
        %1657 = vmatpush1.bf16.msra.mxu0 0
        %1658 = vmatprep.subr.bf16.mxu0 0
        %1659 = vmatpush1.bf16.msra.mxu0 0
        %1660 = vmatprep.subr.bf16.mxu0 0
        %1661 = vmatpush1.bf16.msra.mxu0 0
        %1662 = vmatprep.subr.bf16.mxu0 0
        %1663 = vmatpush1.bf16.msra.mxu0 0
        %1664 = vmatprep.subr.bf16.mxu0 0
        %1665 = vmatpush1.bf16.msra.mxu0 0
        %1666 = vmatprep.subr.bf16.mxu0 0
        %1667 = vmatpush1.bf16.msra.mxu0 0
        %1668 = vmatprep.subr.bf16.mxu0 0
        %1669 = vmatpush1.bf16.msra.mxu0 0
        %1670 = vmatprep.mubr.bf16.mxu0 0
        %1671 = vmatmul.mubr.bf16.gmra.mrb[0].mxu0 %v1633
        %v1672 = vpop.f32.mrb[0].mxu0
        %v1673 = vadd.f32 0.0, %v1672
        %v1674 = vpop.f32.mrb[0].mxu0
        %v1675 = vpop.f32.mrb[0].mxu0
        %v1676 = vadd.f32 0.0, %v1675
        %v1677 = vpop.f32.mrb[0].mxu0
        %1678 = vmatprep.mubr.bf16.mxu0 0
        %1679 = vmatmul.mubr.bf16.gmra.mrb[0].mxu0 %v1636
        %v1680 = vpop.f32.mrb[0].mxu0
        %v1681 = vadd.f32 0.0, %v1680
        %v1682 = vpop.f32.mrb[0].mxu0
        %v1683 = vpop.f32.mrb[0].mxu0
        %v1684 = vadd.f32 0.0, %v1683
        %v1685 = vpop.f32.mrb[0].mxu0
        %1686 = vdwg.mxu0
        %v1687 = vadd.f32 %v1337, %v1673
        %v1688 = vadd.f32 %v1338, %v1676
        %v1689 = vadd.f32 %v1339, %v1681
        %v1690 = vadd.f32 %v1340, %v1684
        %v1691 = vld [vmem:[%s4] sm:$0x1]
        %v1693 = vlaneseq
        %v1694 = vshrl.u32 %v1693, 7
        %v1695 = vsub.s32 0, %v1694
        %v1696 = vrot.slane %v1691, %v1695
        %v1698 = vadd.f32 %v1687, %v1696
        %v1699 = vadd.f32 %v1688, %v1696
        %v1700 = vadd.f32 %v1689, %v1696
        %v1701 = vadd.f32 %v1690, %v1696
        %v1702 = vmax.f32 %v1698, 0.0
        %v1703 = vmax.f32 %v1699, 0.0
        %v1704 = vmax.f32 %v1700, 0.0
        %v1705 = vmax.f32 %v1701, 0.0
        %1706 = vst [vmem:[%s272] sm:$0xff] %v1702
        %1707 = vst [vmem:[%s272 + $0x8] sm:$0xff] %v1703
        %1708 = vst [vmem:[%s272 + $0x10] sm:$0xff] %v1704
        %1709 = vst [vmem:[%s272 + $0x18] sm:$0xff] %v1705
        %s1710 = sand.u32 %s141, 1
        %s1711 = scalar_lea.sflag [#allocation4], %s1710
        %s1712 = sand.u32 %s141, 1
        %s1713 = smul.addr %s1712, 32
        %s1714 = scalar_lea.vmem [#allocation8], %s1713
        // Predicated region
        $region53: #{tpu_custom_call.1} parent=39 // pred_check
          %p1715 = pneg %p151
        $region54: #{tpu_custom_call.1} parent=39 // pred_check_branch
          %1717 = sbr.rel (%p1715) target = $region56
        $region55: #{tpu_custom_call.1} parent=39 // pred_region
          %s1718 = smul.u32 4, %s23
          %s1720 = ssub.s32 512, 512
          %1721 = vsyncadd %s1711, %s1720
          %s1722 = smul.addr %s1718, 128
          %s1723 = scalar_lea.hbm %s5, %s1722
          %s1724 = sshll.u32 %s1714, 4
          %s1725 = int_to_ptr.vmem [resolvable:$true] %s1724
          %1730 = dma.vmem_to_hbm [thread:$0]  %s1725, 512, %s1723, %s1711, 128, 128, 8
        $region56: #{tpu_custom_call.1} parent=39 // pred_fallthru
          _
      $region40: #{tpu_custom_call.1} parent=5 // pred_fallthru
        _
      %p1731 = scmp.le.s32.totalorder 2, %s18
      // Predicated region
      $region57: #{tpu_custom_call.1} parent=5 // pred_check
        %p1732 = pneg %p1731
      $region58: #{tpu_custom_call.1} parent=5 // pred_check_branch
        %1734 = sbr.rel (%p1732) target = $region60
      $region59: #{tpu_custom_call.1} parent=5 // pred_region
        %s1735 = ssub.s32 %s18, 2
        // Predicated region
        $region61: #{tpu_custom_call.1} parent=59 // pred_check
          %p1736 = pneg %p157
        $region62: #{tpu_custom_call.1} parent=59 // pred_check_branch
          %1738 = sbr.rel (%p1736) target = $region64
        $region63: #{tpu_custom_call.1} parent=59 // pred_region
          %s1739 = sand.u32 %s142, 1
          %s1740 = scalar_lea.sflag [#allocation4], %s1739
          %s1741 = sand.u32 %s142, 1
          %s1742 = smul.addr %s1741, 32
          %s1743 = scalar_lea.vmem [#allocation8], %s1742
          %1744 = dma.done %s1740, 512
        $region64: #{tpu_custom_call.1} parent=59 // pred_fallthru
          _
      $region60: #{tpu_custom_call.1} parent=5 // pred_fallthru
        _
    $region6: #{tpu_custom_call.1} parent=1 // loop_footer
      %s22 = sadd.s32 1, %s18
    $region7: #{tpu_custom_call.1} parent=1 // loop_footer_branch
      %17 = sbr.rel target = $region3
    $region8: #{tpu_custom_call.1} parent=1 // loop_exit
      _
    %1745 = vsyncpa [#allocation3], 1
    %s1746 = scalar_lea.sflag [#allocation3], 1
    %1747 = vsyncpa %s1746, 1
    %1748 = vsyncpa [#allocation6], 1
    %1749 = vsyncpa [#allocation4], 1
    %s1750 = scalar_lea.sflag [#allocation4], 1
    %1751 = vsyncpa %s1750, 1

</llo_original>
